<compile_context>
chip_gen: v7x
topology: tpu7x:2x2x1
jax: 0.10.0
libtpu: 0.0.40
codegen_flags: <defaults>
</compile_context>

<pallas_src>
import functools

import jax
import jax.numpy as jnp
from jax.experimental import pallas as pl
from jax.experimental.pallas import tpu as pltpu


def mha_kernel(x_ref, wqkv_ref, wo_ref, bqkv_ref, bo_ref, out_ref, ctx_ref,
               *, n_head, batch_tile, seq_len):
    """One grid step == one batch tile (batch_tile elements, flattened to rows).

    x_ref:    (rows, D)   rows = batch_tile * seq_len
    wqkv_ref: (D, 3D)     [scale*Wq^T | Wk^T | Wv^T]
    wo_ref:   (D, D)      Wo^T
    bqkv_ref: (1, 3D)     [scale*bq | bk | bv]
    bo_ref:   (1, D)
    out_ref:  (rows, D)
    ctx_ref:  (rows, D)   f32 VMEM scratch holding the concatenated head outputs
    """
    rows, D = x_ref.shape
    d_head = D // n_head

    # Fused QKV projection: one wide MXU matmul over the whole batch tile.
    # (scale is already folded into the Q columns of wqkv / bqkv.)
    x = x_ref[...]
    qkv = jnp.dot(x, wqkv_ref[...], preferred_element_type=jnp.float32) + bqkv_ref[0]

    # Re-expose the batch structure for the per-batch attention (splits the
    # sublane axis at a multiple of 8 -> layout-friendly reshape).
    q = qkv[:, 0:D].reshape(batch_tile, seq_len, D)
    k = qkv[:, D:2 * D].reshape(batch_tile, seq_len, D)
    v = qkv[:, 2 * D:3 * D].reshape(batch_tile, seq_len, D)

    # Static per-head loop (n_head is small); head h == feature columns
    # [h*dh, (h+1)*dh), exactly like torch's view(B,S,H,dh).transpose(1,2).
    # TODO(synk): at production d_head (>=128) these become aligned lane views;
    # at d_head=8 the relayout cost is accepted (demo shapes).
    for h in range(n_head):
        lo, hi = h * d_head, (h + 1) * d_head
        qh = q[..., lo:hi]                              # (Tb, S, dh)
        kh = k[..., lo:hi]
        vh = v[..., lo:hi]

        # score = q_h @ k_h^T, batched over the batch tile, contracting
        # last-vs-last dims (no explicit transpose of kh).
        s = jnp.einsum('bqd,bkd->bqk', qh, kh,
                       preferred_element_type=jnp.float32)          # (Tb, S, S)

        # Numerically-stable softmax numerator; normalization deferred to the
        # small (Tb, S, dh) head output. Exact reciprocal keeps the 1e-4 tolerance.
        s = s - jnp.max(s, axis=-1, keepdims=True)
        p = jnp.exp(s)
        inv = pl.reciprocal(jnp.sum(p, axis=-1, keepdims=True))      # (Tb, S, 1)

        o_h = jnp.einsum('bqk,bkd->bqd', p, vh,
                         preferred_element_type=jnp.float32) * inv   # (Tb, S, dh)

        # "concat": write the head output at its static lane offset in the
        # context scratch slab.
        ctx_ref[:, lo:hi] = o_h.reshape(rows, d_head)

    # Single fused output projection over the whole batch tile.
    out = jnp.dot(ctx_ref[...], wo_ref[...],
                  preferred_element_type=jnp.float32) + bo_ref[0]
    out_ref[...] = out.astype(out_ref.dtype)


def prepare_mha_params(params, n_head):
    """One-time parameter fusion (hoisted out of the per-call path).

    Transposes torch-style (out, in) Linear weights, folds 1/sqrt(d_head) into
    the Q projection, and concatenates Q/K/V into one wide weight / bias.
    """
    d_model = params["w_q"]["weight"].shape[0]
    assert d_model % n_head == 0, "d_model must be divisible by n_head"
    d_head = d_model // n_head
    scale = 1.0 / (d_head ** 0.5)

    wq_t = params["w_q"]["weight"].T * scale          # scale folded into Q weight
    bq = params["w_q"]["bias"] * scale                # ... and Q bias
    wk_t = params["w_k"]["weight"].T
    wv_t = params["w_v"]["weight"].T

    wqkv_t = jnp.concatenate([wq_t, wk_t, wv_t], axis=1)                 # (D, 3D)
    bqkv = jnp.concatenate([bq, params["w_k"]["bias"],
                            params["w_v"]["bias"]])[None, :]             # (1, 3D)
    wo_t = params["w_o"]["weight"].T                                     # (D, D)
    bo = params["w_o"]["bias"][None, :]                                  # (1, D)
    return {"wqkv_t": wqkv_t, "bqkv": bqkv, "wo_t": wo_t, "bo": bo}


def multi_head_attention(x, fused, n_head, batch_tile=None):
    """x: (B, S, D) float32.  fused: output of prepare_mha_params."""
    B, S, D = x.shape
    assert D % n_head == 0, "d_model must be divisible by n_head"
    d_head = D // n_head
    assert d_head % 8 == 0, (
        "d_head must be a multiple of 8 (sublane-clean head slices); got %d" % d_head)

    if batch_tile is None:
        # Fold the whole batch into a single block/grid step at small shapes.
        # TODO(synk): on v7x (2 TensorCores) use batch_tile = cdiv(B, 2) so the
        # parallel grid axis keeps both cores busy.
        batch_tile = B
    assert B % batch_tile == 0, "B must be divisible by batch_tile"
    n_btiles = B // batch_tile
    rows = batch_tile * S

    # Flatten batch*seq into rows so the projections are single wide matmuls.
    x_flat = x.reshape(B * S, D)

    kernel = functools.partial(mha_kernel, n_head=n_head,
                               batch_tile=batch_tile, seq_len=S)

    # Advisory cost estimate (flops / transcendentals / bytes) for XLA scheduling.
    flops = (2 * B * S * D * (3 * D)      # fused QKV projection
             + 4 * B * S * S * D          # scores + p@v across all heads
             + 2 * B * S * D * D)         # output projection
    transcendentals = B * n_head * S * S  # exp
    bytes_accessed = 4 * (2 * B * S * D + D * 3 * D + D * D + 3 * D + D)

    # VMEM limit derived from the actual per-step block footprint (x2 for the
    # compiler's double buffers on inputs/outputs) plus scratch and headroom.
    block_in_bytes = 4 * (rows * D + D * 3 * D + D * D + 3 * D + D)
    block_out_bytes = 4 * rows * D
    scratch_bytes = 4 * rows * D
    vmem_limit = int(min(128 * 1024 * 1024,
                         max(4 * 1024 * 1024,
                             2 * (block_in_bytes + block_out_bytes)
                             + scratch_bytes + (1 << 20))))

    out_flat = pl.pallas_call(
        kernel,
        out_shape=jax.ShapeDtypeStruct((B * S, D), x.dtype),
        grid_spec=pltpu.PrefetchScalarGridSpec(
            num_scalar_prefetch=0,
            grid=(n_btiles,),
            in_specs=[
                pl.BlockSpec((rows, D), lambda b: (b, 0)),        # x rows for this tile
                pl.BlockSpec((D, 3 * D), lambda b: (0, 0)),       # [scale*Wq|Wk|Wv]^T
                pl.BlockSpec((D, D), lambda b: (0, 0)),           # Wo^T
                pl.BlockSpec((1, 3 * D), lambda b: (0, 0)),       # [scale*bq|bk|bv]
                pl.BlockSpec((1, D), lambda b: (0, 0)),           # bo
            ],
            out_specs=pl.BlockSpec((rows, D), lambda b: (b, 0)),
            scratch_shapes=[pltpu.VMEM((rows, D), jnp.float32)],  # context ("concat") slab
        ),
        compiler_params=pltpu.CompilerParams(
            dimension_semantics=("parallel",),
            vmem_limit_bytes=vmem_limit,
        ),
        cost_estimate=pl.CostEstimate(flops=flops,
                                      transcendentals=transcendentals,
                                      bytes_accessed=bytes_accessed),
    )(x_flat, fused["wqkv_t"], fused["wo_t"], fused["bqkv"], fused["bo"])

    return out_flat.reshape(B, S, D)


def _reference(x, params, n_head):
    """Pure-JAX reference mirroring the PyTorch module exactly."""
    B, S, D = x.shape
    dh = D // n_head

    def linear(t, p):
        return t @ p["weight"].T + p["bias"]

    q = linear(x, params["w_q"])
    k = linear(x, params["w_k"])
    v = linear(x, params["w_v"])

    def split(t):
        return t.reshape(B, S, n_head, dh).transpose(0, 2, 1, 3)   # (B,H,S,dh)

    q, k, v = split(q), split(k), split(v)
    score = (q @ k.transpose(0, 1, 3, 2)) / (dh ** 0.5)
    score = jax.nn.softmax(score, axis=-1)
    out = score @ v                                                # (B,H,S,dh)
    out = out.transpose(0, 2, 1, 3).reshape(B, S, D)               # concat
    return linear(out, params["w_o"])


if __name__ == "__main__":
    B, S, d_model, n_head = 2, 8, 32, 4

    key = jax.random.PRNGKey(0)
    keys = jax.random.split(key, 9)

    def init_linear(kw, kb, d):
        # deterministic synthetic init (roughly torch's uniform(-1/sqrt(d), 1/sqrt(d)))
        bound = 1.0 / (d ** 0.5)
        w = jax.random.uniform(kw, (d, d), jnp.float32, -bound, bound)
        b = jax.random.uniform(kb, (d,), jnp.float32, -bound, bound)
        return {"weight": w, "bias": b}

    params = {
        "w_q": init_linear(keys[0], keys[1], d_model),
        "w_k": init_linear(keys[2], keys[3], d_model),
        "w_v": init_linear(keys[4], keys[5], d_model),
        "w_o": init_linear(keys[6], keys[7], d_model),
    }

    x = jax.random.normal(keys[8], (B, S, d_model), jnp.float32)

    fused = prepare_mha_params(params, n_head)          # one-time param fusion
    out = multi_head_attention(x, fused, n_head)
    out = jax.block_until_ready(out)

    ref = _reference(x, params, n_head)
    assert out.shape == (B, S, d_model)
    assert jnp.allclose(out, ref, atol=1e-4, rtol=1e-4), "mismatch vs reference"

    print("KERNEL_OK")
</pallas_src>

<mosaic_0001>
module attributes {stable_mosaic.version = 11 : i64} {
  func.func @mha_kernel(%arg0: i32, %arg1: memref<16x32xf32, #tpu.memory_space<vmem>>, %arg2: memref<32x96xf32, #tpu.memory_space<vmem>>, %arg3: memref<32x32xf32, #tpu.memory_space<vmem>>, %arg4: memref<1x96xf32, #tpu.memory_space<vmem>>, %arg5: memref<1x32xf32, #tpu.memory_space<vmem>>, %arg6: memref<16x32xf32, #tpu.memory_space<vmem>>, %arg7: memref<16x32xf32, #tpu.memory_space<vmem>>) attributes {dimension_semantics = [#tpu.dimension_semantics<parallel>], iteration_bounds = array<i64: 1>, scalar_prefetch = 0 : i64, scratch_operands = 1 : i64, tpu.core_type = #tpu.core_type<tc>, window_params = [{transform_indices = @transform_0, window_bounds = array<i64: 16, 32>}, {pipeline_mode = #tpu.pipeline_mode<synchronous>, transform_indices = @transform_1, window_bounds = array<i64: 32, 96>}, {pipeline_mode = #tpu.pipeline_mode<synchronous>, transform_indices = @transform_2, window_bounds = array<i64: 32, 32>}, {pipeline_mode = #tpu.pipeline_mode<synchronous>, transform_indices = @transform_3, window_bounds = array<i64: 1, 96>}, {pipeline_mode = #tpu.pipeline_mode<synchronous>, transform_indices = @transform_4, window_bounds = array<i64: 1, 32>}, {transform_indices = @transform_5, window_bounds = array<i64: 16, 32>}]} {
    %c0 = arith.constant 0 : index
    %c0_0 = arith.constant 0 : index
    %0 = vector.load %arg1[%c0, %c0_0] : memref<16x32xf32, #tpu.memory_space<vmem>>, vector<16x32xf32>
    %c0_1 = arith.constant 0 : index
    %c0_2 = arith.constant 0 : index
    %1 = vector.load %arg2[%c0_1, %c0_2] : memref<32x96xf32, #tpu.memory_space<vmem>>, vector<32x96xf32>
    %cst = arith.constant dense<0.000000e+00> : vector<16x96xf32>
    %2 = tpu.matmul %0, %1, %cst {dimension_numbers = #tpu.dot_dimension_numbers<[1], [0], [0], [1], [0, 0, 1, 1], [], []>} : vector<16x32xf32>, vector<32x96xf32>, vector<16x96xf32> -> vector<16x96xf32>
    %c0_3 = arith.constant 0 : index
    %c0_4 = arith.constant 0 : index
    %3 = vector.load %arg4[%c0_3, %c0_4] : memref<1x96xf32, #tpu.memory_space<vmem>>, vector<1x96xf32>
    %4 = vector.shape_cast %3 : vector<1x96xf32> to vector<96xf32>
    %5 = vector.shape_cast %4 : vector<96xf32> to vector<1x96xf32>
    %6 = vector.broadcast %5 : vector<1x96xf32> to vector<16x96xf32>
    %7 = arith.addf %2, %6 : vector<16x96xf32>
    %8 = vector.extract_strided_slice %7 {offsets = [0, 0], sizes = [16, 32], strides = [1, 1]} : vector<16x96xf32> to vector<16x32xf32>
    %9 = vector.shape_cast %8 : vector<16x32xf32> to vector<2x8x32xf32>
    %10 = vector.extract_strided_slice %7 {offsets = [0, 32], sizes = [16, 32], strides = [1, 1]} : vector<16x96xf32> to vector<16x32xf32>
    %11 = vector.shape_cast %10 : vector<16x32xf32> to vector<2x8x32xf32>
    %12 = vector.extract_strided_slice %7 {offsets = [0, 64], sizes = [16, 32], strides = [1, 1]} : vector<16x96xf32> to vector<16x32xf32>
    %13 = vector.shape_cast %12 : vector<16x32xf32> to vector<2x8x32xf32>
    %14 = vector.extract_strided_slice %9 {offsets = [0, 0, 0], sizes = [2, 8, 8], strides = [1, 1, 1]} : vector<2x8x32xf32> to vector<2x8x8xf32>
    %15 = vector.extract_strided_slice %11 {offsets = [0, 0, 0], sizes = [2, 8, 8], strides = [1, 1, 1]} : vector<2x8x32xf32> to vector<2x8x8xf32>
    %16 = vector.extract_strided_slice %13 {offsets = [0, 0, 0], sizes = [2, 8, 8], strides = [1, 1, 1]} : vector<2x8x32xf32> to vector<2x8x8xf32>
    "tpu.trace_start"() <{level = 10 : i32, message = "bqd,bkd->bqk"}> : () -> ()
    %cst_5 = arith.constant dense<0.000000e+00> : vector<2x8x8xf32>
    %17 = tpu.matmul %14, %15, %cst_5 {dimension_numbers = #tpu.dot_dimension_numbers<[2], [2], [1], [1], [0, 0, 0, 1, 1, 1], [0], [0]>} : vector<2x8x8xf32>, vector<2x8x8xf32>, vector<2x8x8xf32> -> vector<2x8x8xf32>
    "tpu.trace_stop"() : () -> ()
    %cst_6 = arith.constant dense<0xFF800000> : vector<2x8xf32>
    %18 = vector.multi_reduction <maximumf>, %17, %cst_6 [2] : vector<2x8x8xf32> to vector<2x8xf32>
    %19 = vector.shape_cast %18 : vector<2x8xf32> to vector<2x8x1xf32>
    %20 = vector.broadcast %19 : vector<2x8x1xf32> to vector<2x8x8xf32>
    %21 = arith.subf %17, %20 : vector<2x8x8xf32>
    %22 = math.exp %21 : vector<2x8x8xf32>
    %cst_7 = arith.constant dense<0.000000e+00> : vector<2x8xf32>
    %23 = vector.multi_reduction <add>, %22, %cst_7 [2] : vector<2x8x8xf32> to vector<2x8xf32>
    %24 = vector.shape_cast %23 : vector<2x8xf32> to vector<2x8x1xf32>
    %25 = tpu.reciprocal %24 : vector<2x8x1xf32> -> vector<2x8x1xf32>
    "tpu.trace_start"() <{level = 10 : i32, message = "bqk,bkd->bqd"}> : () -> ()
    %cst_8 = arith.constant dense<0.000000e+00> : vector<2x8x8xf32>
    %26 = tpu.matmul %22, %16, %cst_8 {dimension_numbers = #tpu.dot_dimension_numbers<[2], [1], [1], [2], [0, 0, 0, 1, 1, 2], [0], [0]>} : vector<2x8x8xf32>, vector<2x8x8xf32>, vector<2x8x8xf32> -> vector<2x8x8xf32>
    "tpu.trace_stop"() : () -> ()
    %27 = vector.broadcast %25 : vector<2x8x1xf32> to vector<2x8x8xf32>
    %28 = arith.mulf %26, %27 : vector<2x8x8xf32>
    %29 = vector.shape_cast %28 : vector<2x8x8xf32> to vector<16x8xf32>
    %c0_9 = arith.constant 0 : index
    %c0_10 = arith.constant 0 : index
    %30 = vector.load %arg7[%c0_9, %c0_10] : memref<16x32xf32, #tpu.memory_space<vmem>>, vector<16x8xf32>
    tpu.vector_store %arg7[%c0_9, %c0_10], %29 {strides = array<i32>} : memref<16x32xf32, #tpu.memory_space<vmem>>, vector<16x8xf32>,
    %31 = vector.extract_strided_slice %9 {offsets = [0, 0, 8], sizes = [2, 8, 8], strides = [1, 1, 1]} : vector<2x8x32xf32> to vector<2x8x8xf32>
    %32 = vector.extract_strided_slice %11 {offsets = [0, 0, 8], sizes = [2, 8, 8], strides = [1, 1, 1]} : vector<2x8x32xf32> to vector<2x8x8xf32>
    %33 = vector.extract_strided_slice %13 {offsets = [0, 0, 8], sizes = [2, 8, 8], strides = [1, 1, 1]} : vector<2x8x32xf32> to vector<2x8x8xf32>
    "tpu.trace_start"() <{level = 10 : i32, message = "bqd,bkd->bqk"}> : () -> ()
    %cst_11 = arith.constant dense<0.000000e+00> : vector<2x8x8xf32>
    %34 = tpu.matmul %31, %32, %cst_11 {dimension_numbers = #tpu.dot_dimension_numbers<[2], [2], [1], [1], [0, 0, 0, 1, 1, 1], [0], [0]>} : vector<2x8x8xf32>, vector<2x8x8xf32>, vector<2x8x8xf32> -> vector<2x8x8xf32>
    "tpu.trace_stop"() : () -> ()
    %cst_12 = arith.constant dense<0xFF800000> : vector<2x8xf32>
    %35 = vector.multi_reduction <maximumf>, %34, %cst_12 [2] : vector<2x8x8xf32> to vector<2x8xf32>
    %36 = vector.shape_cast %35 : vector<2x8xf32> to vector<2x8x1xf32>
    %37 = vector.broadcast %36 : vector<2x8x1xf32> to vector<2x8x8xf32>
    %38 = arith.subf %34, %37 : vector<2x8x8xf32>
    %39 = math.exp %38 : vector<2x8x8xf32>
    %cst_13 = arith.constant dense<0.000000e+00> : vector<2x8xf32>
    %40 = vector.multi_reduction <add>, %39, %cst_13 [2] : vector<2x8x8xf32> to vector<2x8xf32>
    %41 = vector.shape_cast %40 : vector<2x8xf32> to vector<2x8x1xf32>
    %42 = tpu.reciprocal %41 : vector<2x8x1xf32> -> vector<2x8x1xf32>
    "tpu.trace_start"() <{level = 10 : i32, message = "bqk,bkd->bqd"}> : () -> ()
    %cst_14 = arith.constant dense<0.000000e+00> : vector<2x8x8xf32>
    %43 = tpu.matmul %39, %33, %cst_14 {dimension_numbers = #tpu.dot_dimension_numbers<[2], [1], [1], [2], [0, 0, 0, 1, 1, 2], [0], [0]>} : vector<2x8x8xf32>, vector<2x8x8xf32>, vector<2x8x8xf32> -> vector<2x8x8xf32>
    "tpu.trace_stop"() : () -> ()
    %44 = vector.broadcast %42 : vector<2x8x1xf32> to vector<2x8x8xf32>
    %45 = arith.mulf %43, %44 : vector<2x8x8xf32>
    %46 = vector.shape_cast %45 : vector<2x8x8xf32> to vector<16x8xf32>
    %c0_15 = arith.constant 0 : index
    %c8 = arith.constant 8 : index
    %47 = vector.load %arg7[%c0_15, %c8] : memref<16x32xf32, #tpu.memory_space<vmem>>, vector<16x8xf32>
    tpu.vector_store %arg7[%c0_15, %c8], %46 {strides = array<i32>} : memref<16x32xf32, #tpu.memory_space<vmem>>, vector<16x8xf32>,
    %48 = vector.extract_strided_slice %9 {offsets = [0, 0, 16], sizes = [2, 8, 8], strides = [1, 1, 1]} : vector<2x8x32xf32> to vector<2x8x8xf32>
    %49 = vector.extract_strided_slice %11 {offsets = [0, 0, 16], sizes = [2, 8, 8], strides = [1, 1, 1]} : vector<2x8x32xf32> to vector<2x8x8xf32>
    %50 = vector.extract_strided_slice %13 {offsets = [0, 0, 16], sizes = [2, 8, 8], strides = [1, 1, 1]} : vector<2x8x32xf32> to vector<2x8x8xf32>
    "tpu.trace_start"() <{level = 10 : i32, message = "bqd,bkd->bqk"}> : () -> ()
    %cst_16 = arith.constant dense<0.000000e+00> : vector<2x8x8xf32>
    %51 = tpu.matmul %48, %49, %cst_16 {dimension_numbers = #tpu.dot_dimension_numbers<[2], [2], [1], [1], [0, 0, 0, 1, 1, 1], [0], [0]>} : vector<2x8x8xf32>, vector<2x8x8xf32>, vector<2x8x8xf32> -> vector<2x8x8xf32>
    "tpu.trace_stop"() : () -> ()
    %cst_17 = arith.constant dense<0xFF800000> : vector<2x8xf32>
    %52 = vector.multi_reduction <maximumf>, %51, %cst_17 [2] : vector<2x8x8xf32> to vector<2x8xf32>
    %53 = vector.shape_cast %52 : vector<2x8xf32> to vector<2x8x1xf32>
    %54 = vector.broadcast %53 : vector<2x8x1xf32> to vector<2x8x8xf32>
    %55 = arith.subf %51, %54 : vector<2x8x8xf32>
    %56 = math.exp %55 : vector<2x8x8xf32>
    %cst_18 = arith.constant dense<0.000000e+00> : vector<2x8xf32>
    %57 = vector.multi_reduction <add>, %56, %cst_18 [2] : vector<2x8x8xf32> to vector<2x8xf32>
    %58 = vector.shape_cast %57 : vector<2x8xf32> to vector<2x8x1xf32>
    %59 = tpu.reciprocal %58 : vector<2x8x1xf32> -> vector<2x8x1xf32>
    "tpu.trace_start"() <{level = 10 : i32, message = "bqk,bkd->bqd"}> : () -> ()
    %cst_19 = arith.constant dense<0.000000e+00> : vector<2x8x8xf32>
    %60 = tpu.matmul %56, %50, %cst_19 {dimension_numbers = #tpu.dot_dimension_numbers<[2], [1], [1], [2], [0, 0, 0, 1, 1, 2], [0], [0]>} : vector<2x8x8xf32>, vector<2x8x8xf32>, vector<2x8x8xf32> -> vector<2x8x8xf32>
    "tpu.trace_stop"() : () -> ()
    %61 = vector.broadcast %59 : vector<2x8x1xf32> to vector<2x8x8xf32>
    %62 = arith.mulf %60, %61 : vector<2x8x8xf32>
    %63 = vector.shape_cast %62 : vector<2x8x8xf32> to vector<16x8xf32>
    %c0_20 = arith.constant 0 : index
    %c16 = arith.constant 16 : index
    %64 = vector.load %arg7[%c0_20, %c16] : memref<16x32xf32, #tpu.memory_space<vmem>>, vector<16x8xf32>
    tpu.vector_store %arg7[%c0_20, %c16], %63 {strides = array<i32>} : memref<16x32xf32, #tpu.memory_space<vmem>>, vector<16x8xf32>,
    %65 = vector.extract_strided_slice %9 {offsets = [0, 0, 24], sizes = [2, 8, 8], strides = [1, 1, 1]} : vector<2x8x32xf32> to vector<2x8x8xf32>
    %66 = vector.extract_strided_slice %11 {offsets = [0, 0, 24], sizes = [2, 8, 8], strides = [1, 1, 1]} : vector<2x8x32xf32> to vector<2x8x8xf32>
    %67 = vector.extract_strided_slice %13 {offsets = [0, 0, 24], sizes = [2, 8, 8], strides = [1, 1, 1]} : vector<2x8x32xf32> to vector<2x8x8xf32>
    "tpu.trace_start"() <{level = 10 : i32, message = "bqd,bkd->bqk"}> : () -> ()
    %cst_21 = arith.constant dense<0.000000e+00> : vector<2x8x8xf32>
    %68 = tpu.matmul %65, %66, %cst_21 {dimension_numbers = #tpu.dot_dimension_numbers<[2], [2], [1], [1], [0, 0, 0, 1, 1, 1], [0], [0]>} : vector<2x8x8xf32>, vector<2x8x8xf32>, vector<2x8x8xf32> -> vector<2x8x8xf32>
    "tpu.trace_stop"() : () -> ()
    %cst_22 = arith.constant dense<0xFF800000> : vector<2x8xf32>
    %69 = vector.multi_reduction <maximumf>, %68, %cst_22 [2] : vector<2x8x8xf32> to vector<2x8xf32>
    %70 = vector.shape_cast %69 : vector<2x8xf32> to vector<2x8x1xf32>
    %71 = vector.broadcast %70 : vector<2x8x1xf32> to vector<2x8x8xf32>
    %72 = arith.subf %68, %71 : vector<2x8x8xf32>
    %73 = math.exp %72 : vector<2x8x8xf32>
    %cst_23 = arith.constant dense<0.000000e+00> : vector<2x8xf32>
    %74 = vector.multi_reduction <add>, %73, %cst_23 [2] : vector<2x8x8xf32> to vector<2x8xf32>
    %75 = vector.shape_cast %74 : vector<2x8xf32> to vector<2x8x1xf32>
    %76 = tpu.reciprocal %75 : vector<2x8x1xf32> -> vector<2x8x1xf32>
    "tpu.trace_start"() <{level = 10 : i32, message = "bqk,bkd->bqd"}> : () -> ()
    %cst_24 = arith.constant dense<0.000000e+00> : vector<2x8x8xf32>
    %77 = tpu.matmul %73, %67, %cst_24 {dimension_numbers = #tpu.dot_dimension_numbers<[2], [1], [1], [2], [0, 0, 0, 1, 1, 2], [0], [0]>} : vector<2x8x8xf32>, vector<2x8x8xf32>, vector<2x8x8xf32> -> vector<2x8x8xf32>
    "tpu.trace_stop"() : () -> ()
    %78 = vector.broadcast %76 : vector<2x8x1xf32> to vector<2x8x8xf32>
    %79 = arith.mulf %77, %78 : vector<2x8x8xf32>
    %80 = vector.shape_cast %79 : vector<2x8x8xf32> to vector<16x8xf32>
    %c0_25 = arith.constant 0 : index
    %c24 = arith.constant 24 : index
    %81 = vector.load %arg7[%c0_25, %c24] : memref<16x32xf32, #tpu.memory_space<vmem>>, vector<16x8xf32>
    tpu.vector_store %arg7[%c0_25, %c24], %80 {strides = array<i32>} : memref<16x32xf32, #tpu.memory_space<vmem>>, vector<16x8xf32>,
    %c0_26 = arith.constant 0 : index
    %c0_27 = arith.constant 0 : index
    %82 = vector.load %arg7[%c0_26, %c0_27] : memref<16x32xf32, #tpu.memory_space<vmem>>, vector<16x32xf32>
    %c0_28 = arith.constant 0 : index
    %c0_29 = arith.constant 0 : index
    %83 = vector.load %arg3[%c0_28, %c0_29] : memref<32x32xf32, #tpu.memory_space<vmem>>, vector<32x32xf32>
    %cst_30 = arith.constant dense<0.000000e+00> : vector<16x32xf32>
    %84 = tpu.matmul %82, %83, %cst_30 {dimension_numbers = #tpu.dot_dimension_numbers<[1], [0], [0], [1], [0, 0, 1, 1], [], []>} : vector<16x32xf32>, vector<32x32xf32>, vector<16x32xf32> -> vector<16x32xf32>
    %c0_31 = arith.constant 0 : index
    %c0_32 = arith.constant 0 : index
    %85 = vector.load %arg5[%c0_31, %c0_32] : memref<1x32xf32, #tpu.memory_space<vmem>>, vector<1x32xf32>
    %86 = vector.shape_cast %85 : vector<1x32xf32> to vector<32xf32>
    %87 = vector.shape_cast %86 : vector<32xf32> to vector<1x32xf32>
    %88 = vector.broadcast %87 : vector<1x32xf32> to vector<16x32xf32>
    %89 = arith.addf %84, %88 : vector<16x32xf32>
    %c0_33 = arith.constant 0 : index
    %c0_34 = arith.constant 0 : index
    %90 = vector.load %arg6[%c0_33, %c0_34] : memref<16x32xf32, #tpu.memory_space<vmem>>, vector<16x32xf32>
    tpu.vector_store %arg6[%c0_33, %c0_34], %89 {strides = array<i32>} : memref<16x32xf32, #tpu.memory_space<vmem>>, vector<16x32xf32>,
    return
  }
  func.func @transform_0(%arg0: i32) -> (i32, i32) {
    %c0_i32 = arith.constant 0 : i32
    %c0_i32_0 = arith.constant 0 : i32
    return %arg0, %c0_i32 : i32, i32
  }
  func.func @transform_1(%arg0: i32) -> (i32, i32) {
    %c0_i32 = arith.constant 0 : i32
    %c0_i32_0 = arith.constant 0 : i32
    %c0_i32_1 = arith.constant 0 : i32
    return %c0_i32, %c0_i32_0 : i32, i32
  }
  func.func @transform_2(%arg0: i32) -> (i32, i32) {
    %c0_i32 = arith.constant 0 : i32
    %c0_i32_0 = arith.constant 0 : i32
    %c0_i32_1 = arith.constant 0 : i32
    return %c0_i32, %c0_i32_0 : i32, i32
  }
  func.func @transform_3(%arg0: i32) -> (i32, i32) {
    %c0_i32 = arith.constant 0 : i32
    %c0_i32_0 = arith.constant 0 : i32
    %c0_i32_1 = arith.constant 0 : i32
    return %c0_i32, %c0_i32_0 : i32, i32
  }
  func.func @transform_4(%arg0: i32) -> (i32, i32) {
    %c0_i32 = arith.constant 0 : i32
    %c0_i32_0 = arith.constant 0 : i32
    %c0_i32_1 = arith.constant 0 : i32
    return %c0_i32, %c0_i32_0 : i32, i32
  }
  func.func @transform_5(%arg0: i32) -> (i32, i32) {
    %c0_i32 = arith.constant 0 : i32
    %c0_i32_0 = arith.constant 0 : i32
    return %arg0, %c0_i32 : i32, i32
  }
}

</mosaic_0001>

<llo_original>
// kernel: tpu_custom_call.1
$region0: #{tpu_custom_call.1}
  #allocation0 [shape = 'u32[]', space=smem, size = 0x4, offset = 0x4, fixed_abs, tag = 'smem constant byte address 0x4 - core index']
  #allocation1 [shape = 'u32[144,128]{1,0:T(1,128)}', space=vmem, size = 0x12000, scoped, tag = 'internal scratch']
  #allocation2 [shape = 'f32[16,32]{1,0:T(8,128)}', space=vmem, size = 0x2000, scoped, tag = 'scratch operand']
  %s0 = inlined_call_operand.hbm [shape: f32[16,32], index: 0, kind: input, shape index: {}]
  %s1 = inlined_call_operand.hbm [shape: f32[32,96], index: 1, kind: input, shape index: {}]
  %s2 = inlined_call_operand.hbm [shape: f32[32,32], index: 2, kind: input, shape index: {}]
  %s3 = inlined_call_operand.vmem [shape: f32[1,96], index: 3, kind: input, shape index: {}]
  %s4 = inlined_call_operand.vmem [shape: f32[1,32], index: 4, kind: input, shape index: {}]
  %s5 = inlined_call_operand.hbm [shape: f32[16,32], index: 5, kind: output, shape index: {}]
  %s6 = sld [smem:[#allocation0]]
  $region42: #{tpu_custom_call.1} parent=0
    _
  %s8 = ssub.s32 1, %s6
  %s9 = scalar_select 0, %s8, %s6
  $region1: #{tpu_custom_call.1} parent=0
    #allocation3 [shape = 'u8[8192]{0}', space=vmem, size = 0x2000, scoped, tag = 'input window, operand 0, single buffered']
    #allocation4 [shape = 's32[1]{0}', space=sflag, size = 0x4, scoped, tag = 'scoped memory for tpu_custom_call.1']
    #allocation5 [shape = 's32[1]{0}', space=sflag, size = 0x4, scoped, tag = 'scoped memory for tpu_custom_call.1']
    #allocation6 [shape = 'u8[16384]{0}', space=vmem, size = 0x4000, scoped, tag = 'input window, operand 1, single buffered']
    #allocation7 [shape = 's32[1]{0}', space=sflag, size = 0x4, scoped, tag = 'scoped memory for tpu_custom_call.1']
    #allocation8 [shape = 'u8[16384]{0}', space=vmem, size = 0x4000, scoped, tag = 'input window, operand 2, single buffered']
    #allocation9 [shape = 'u8[8192]{0}', space=vmem, size = 0x2000, scoped, tag = 'output window, operand 0, single buffered']
    %10 = vsyncpa [#allocation4], 0
    %11 = vsyncpa [#allocation7], 0
    %12 = vsyncpa [#allocation5], 0
    // Predicated region
    $region2: #{tpu_custom_call.1} parent=1 // pred_check
      _
    $region3: #{tpu_custom_call.1} parent=1 // pred_check_branch
      %14 = sbr.rel (0) target = $region5
    $region4: #{tpu_custom_call.1} parent=1 // pred_region
      %s16 = ssub.s32 256, 256
      %17 = vsyncadd [#allocation4], %s16
      %s18 = sshll.u32 [#allocation3], 4
      %s19 = int_to_ptr.vmem [resolvable:$true] %s18
      %24 = dma.hbm_to_vmem [thread:$0]  %s0, 256, %s19, [#allocation4], 128, 128, 8
    $region5: #{tpu_custom_call.1} parent=1 // pred_fallthru
      _
    // Predicated region
    $region6: #{tpu_custom_call.1} parent=1 // pred_check
      _
    $region7: #{tpu_custom_call.1} parent=1 // pred_check_branch
      %26 = sbr.rel (0) target = $region9
    $region8: #{tpu_custom_call.1} parent=1 // pred_region
      %s28 = ssub.s32 512, 512
      %29 = vsyncadd [#allocation7], %s28
      %s30 = sshll.u32 [#allocation6], 4
      %s31 = int_to_ptr.vmem [resolvable:$true] %s30
      %36 = dma.hbm_to_vmem [thread:$0]  %s1, 512, %s31, [#allocation7], 128, 128, 8
    $region9: #{tpu_custom_call.1} parent=1 // pred_fallthru
      _
    // Predicated region
    $region10: #{tpu_custom_call.1} parent=1 // pred_check
      _
    $region11: #{tpu_custom_call.1} parent=1 // pred_check_branch
      %38 = sbr.rel (0) target = $region13
    $region12: #{tpu_custom_call.1} parent=1 // pred_region
      %s40 = ssub.s32 512, 512
      %41 = vsyncadd [#allocation7], %s40
      %s42 = sshll.u32 [#allocation8], 4
      %s43 = int_to_ptr.vmem [resolvable:$true] %s42
      %48 = dma.hbm_to_vmem [thread:$0]  %s2, 512, %s43, [#allocation7], 128, 128, 8
    $region13: #{tpu_custom_call.1} parent=1 // pred_fallthru
      _
    // Predicated region
    $region14: #{tpu_custom_call.1} parent=1 // pred_check
      _
    $region15: #{tpu_custom_call.1} parent=1 // pred_check_branch
      %50 = sbr.rel (0) target = $region17
    $region16: #{tpu_custom_call.1} parent=1 // pred_region
      _
    $region17: #{tpu_custom_call.1} parent=1 // pred_fallthru
      _
    // Predicated region
    $region18: #{tpu_custom_call.1} parent=1 // pred_check
      _
    $region19: #{tpu_custom_call.1} parent=1 // pred_check_branch
      %52 = sbr.rel (0) target = $region21
    $region20: #{tpu_custom_call.1} parent=1 // pred_region
      _
    $region21: #{tpu_custom_call.1} parent=1 // pred_fallthru
      _
    // Predicated region
    $region22: #{tpu_custom_call.1} parent=1 // pred_check
      _
    $region23: #{tpu_custom_call.1} parent=1 // pred_check_branch
      %54 = sbr.rel (0) target = $region25
    $region24: #{tpu_custom_call.1} parent=1 // pred_region
      %55 = dma.done [#allocation4], 256
    $region25: #{tpu_custom_call.1} parent=1 // pred_fallthru
      _
    // Predicated region
    $region26: #{tpu_custom_call.1} parent=1 // pred_check
      _
    $region27: #{tpu_custom_call.1} parent=1 // pred_check_branch
      %57 = sbr.rel (0) target = $region29
    $region28: #{tpu_custom_call.1} parent=1 // pred_region
      %58 = dma.done [#allocation7], 512
    $region29: #{tpu_custom_call.1} parent=1 // pred_fallthru
      _
    // Predicated region
    $region30: #{tpu_custom_call.1} parent=1 // pred_check
      _
    $region31: #{tpu_custom_call.1} parent=1 // pred_check_branch
      %60 = sbr.rel (0) target = $region33
    $region32: #{tpu_custom_call.1} parent=1 // pred_region
      %61 = dma.done [#allocation7], 512
    $region33: #{tpu_custom_call.1} parent=1 // pred_fallthru
      _
    %v62 = vld [vmem:[#allocation3] sm:$0xff]
    %v63 = vld [vmem:[#allocation3 + $0x8] sm:$0xff]
    %v64 = vld [vmem:[#allocation6] sm:$0xff]
    %v65 = vld [vmem:[#allocation6 + $0x8] sm:$0xff]
    %v66 = vld [vmem:[#allocation6 + $0x10] sm:$0xff]
    %v67 = vld [vmem:[#allocation6 + $0x18] sm:$0xff]
    %v68 = vld [vmem:[%s3] sm:$0x1]
    %v70 = vlaneseq
    %v71 = vshrl.u32 %v70, 7
    %v72 = vsub.s32 0, %v71
    %v73 = vrot.slane %v68, %v72
    %vm75 = vcmask 261120
    %v77 = vsel %vm75, %v62, 0
    %v80 = vsel %vm75, %v63, 0
    %82 = vmatprep.subr.mxu0 0.0
    %83 = vmatpush1.msra.mxu0 %v64
    %84 = vmatprep.subr.mxu0 0.0
    %85 = vmatpush1.msra.mxu0 %v65
    %86 = vmatprep.subr.mxu0 0.0
    %87 = vmatpush1.msra.mxu0 %v66
    %88 = vmatprep.subr.mxu0 0.0
    %89 = vmatpush1.msra.mxu0 %v67
    %90 = vmatprep.subr.mxu0 0.0
    %91 = vmatpush1.msra.mxu0 0.0
    %92 = vmatprep.subr.mxu0 0.0
    %93 = vmatpush1.msra.mxu0 0.0
    %94 = vmatprep.subr.mxu0 0.0
    %95 = vmatpush1.msra.mxu0 0.0
    %96 = vmatprep.subr.mxu0 0.0
    %97 = vmatpush1.msra.mxu0 0.0
    %98 = vmatprep.subr.mxu0 0.0
    %99 = vmatpush1.msra.mxu0 0.0
    %100 = vmatprep.subr.mxu0 0.0
    %101 = vmatpush1.msra.mxu0 0.0
    %102 = vmatprep.subr.mxu0 0.0
    %103 = vmatpush1.msra.mxu0 0.0
    %104 = vmatprep.subr.mxu0 0.0
    %105 = vmatpush1.msra.mxu0 0.0
    %106 = vmatprep.subr.mxu0 0.0
    %107 = vmatpush1.msra.mxu0 0.0
    %108 = vmatprep.subr.mxu0 0.0
    %109 = vmatpush1.msra.mxu0 0.0
    %110 = vmatprep.subr.mxu0 0.0
    %111 = vmatpush1.msra.mxu0 0.0
    %112 = vmatprep.subr.mxu0 0.0
    %113 = vmatpush1.msra.mxu0 0.0
    %114 = vmatprep.subr.mxu0 0.0
    %115 = vmatpush1.msra.mxu0 0.0
    %116 = vmatprep.subr.mxu0 0.0
    %117 = vmatpush1.msra.mxu0 0.0
    %118 = vmatprep.subr.mxu0 0.0
    %119 = vmatpush1.msra.mxu0 0.0
    %120 = vmatprep.subr.mxu0 0.0
    %121 = vmatpush1.msra.mxu0 0.0
    %122 = vmatprep.subr.mxu0 0.0
    %123 = vmatpush1.msra.mxu0 0.0
    %124 = vmatprep.subr.mxu0 0.0
    %125 = vmatpush1.msra.mxu0 0.0
    %126 = vmatprep.subr.mxu0 0.0
    %127 = vmatpush1.msra.mxu0 0.0
    %128 = vmatprep.subr.mxu0 0.0
    %129 = vmatpush1.msra.mxu0 0.0
    %130 = vmatprep.subr.mxu0 0.0
    %131 = vmatpush1.msra.mxu0 0.0
    %132 = vmatprep.subr.mxu0 0.0
    %133 = vmatpush1.msra.mxu0 0.0
    %134 = vmatprep.subr.mxu0 0.0
    %135 = vmatpush1.msra.mxu0 0.0
    %136 = vmatprep.subr.mxu0 0.0
    %137 = vmatpush1.msra.mxu0 0.0
    %138 = vmatprep.subr.mxu0 0.0
    %139 = vmatpush1.msra.mxu0 0.0
    %140 = vmatprep.subr.mxu0 0.0
    %141 = vmatpush1.msra.mxu0 0.0
    %142 = vmatprep.subr.mxu0 0.0
    %143 = vmatpush1.msra.mxu0 0.0
    %144 = vmatprep.subr.mxu0 0.0
    %145 = vmatpush1.msra.mxu0 0.0
    %146 = vmatprep.mubr.f32.mxu0 0.0
    %147 = vmatmul.mubr.f32.gmra.mrb[0].mxu0 %v77
    %v148 = vpop.f32.mrb[0].mxu0
    %v149 = vadd.f32 %v73, %v148
    %v150 = vpop.f32.mrb[0].mxu0
    %151 = vmatprep.mubr.f32.mxu0 0.0
    %152 = vmatmul.mubr.f32.gmra.mrb[0].mxu0 %v80
    %v153 = vpop.f32.mrb[0].mxu0
    %v154 = vadd.f32 %v73, %v153
    %v155 = vpop.f32.mrb[0].mxu0
    %156 = vdwg.mxu0
    %158 = vrot.lane.b32.xlu0 %v149, 96
    %v159 = vpop.permute.xlu0 %158
    %vm160 = vcmask 64512
    %v161 = vsel %vm160, %v149, 0
    %v163 = vsel %vm160, %v159, 0
    %165 = vmatprep.subr.mxu0 0.0
    %166 = vmatpush1.xpose.msra.mxu0 %v163
    %167 = vmatprep.subr.mxu0 0.0
    %168 = vmatpush1.xpose.msra.mxu0 0.0
    %169 = vmatprep.subr.mxu0 0.0
    %170 = vmatpush1.xpose.msra.mxu0 0.0
    %171 = vmatprep.subr.mxu0 0.0
    %172 = vmatpush1.xpose.msra.mxu0 0.0
    %173 = vmatprep.subr.mxu0 0.0
    %174 = vmatpush1.xpose.msra.mxu0 0.0
    %175 = vmatprep.subr.mxu0 0.0
    %176 = vmatpush1.xpose.msra.mxu0 0.0
    %177 = vmatprep.subr.mxu0 0.0
    %178 = vmatpush1.xpose.msra.mxu0 0.0
    %179 = vmatprep.subr.mxu0 0.0
    %180 = vmatpush1.xpose.msra.mxu0 0.0
    %181 = vmatprep.subr.mxu0 0.0
    %182 = vmatpush1.xpose.msra.mxu0 0.0
    %183 = vmatprep.subr.mxu0 0.0
    %184 = vmatpush1.xpose.msra.mxu0 0.0
    %185 = vmatprep.subr.mxu0 0.0
    %186 = vmatpush1.xpose.msra.mxu0 0.0
    %187 = vmatprep.subr.mxu0 0.0
    %188 = vmatpush1.xpose.msra.mxu0 0.0
    %189 = vmatprep.subr.mxu0 0.0
    %190 = vmatpush1.xpose.msra.mxu0 0.0
    %191 = vmatprep.subr.mxu0 0.0
    %192 = vmatpush1.xpose.msra.mxu0 0.0
    %193 = vmatprep.subr.mxu0 0.0
    %194 = vmatpush1.xpose.msra.mxu0 0.0
    %195 = vmatprep.subr.mxu0 0.0
    %196 = vmatpush1.xpose.msra.mxu0 0.0
    %197 = vmatprep.subr.mxu0 0.0
    %198 = vmatpush1.xpose.msra.mxu0 0.0
    %199 = vmatprep.subr.mxu0 0.0
    %200 = vmatpush1.xpose.msra.mxu0 0.0
    %201 = vmatprep.subr.mxu0 0.0
    %202 = vmatpush1.xpose.msra.mxu0 0.0
    %203 = vmatprep.subr.mxu0 0.0
    %204 = vmatpush1.xpose.msra.mxu0 0.0
    %205 = vmatprep.subr.mxu0 0.0
    %206 = vmatpush1.xpose.msra.mxu0 0.0
    %207 = vmatprep.subr.mxu0 0.0
    %208 = vmatpush1.xpose.msra.mxu0 0.0
    %209 = vmatprep.subr.mxu0 0.0
    %210 = vmatpush1.xpose.msra.mxu0 0.0
    %211 = vmatprep.subr.mxu0 0.0
    %212 = vmatpush1.xpose.msra.mxu0 0.0
    %213 = vmatprep.subr.mxu0 0.0
    %214 = vmatpush1.xpose.msra.mxu0 0.0
    %215 = vmatprep.subr.mxu0 0.0
    %216 = vmatpush1.xpose.msra.mxu0 0.0
    %217 = vmatprep.subr.mxu0 0.0
    %218 = vmatpush1.xpose.msra.mxu0 0.0
    %219 = vmatprep.subr.mxu0 0.0
    %220 = vmatpush1.xpose.msra.mxu0 0.0
    %221 = vmatprep.subr.mxu0 0.0
    %222 = vmatpush1.xpose.msra.mxu0 0.0
    %223 = vmatprep.subr.mxu0 0.0
    %224 = vmatpush1.xpose.msra.mxu0 0.0
    %225 = vmatprep.subr.mxu0 0.0
    %226 = vmatpush1.xpose.msra.mxu0 0.0
    %227 = vmatprep.subr.mxu0 0.0
    %228 = vmatpush1.xpose.msra.mxu0 0.0
    %229 = vmatprep.mubr.f32.mxu0 0.0
    %230 = vmatmul.mubr.f32.gmra.mrb[0].mxu0 %v161
    %v231 = vpop.f32.mrb[0].mxu0
    %v232 = vadd.f32 0.0, %v231
    %v233 = vpop.f32.mrb[0].mxu0
    %234 = vdwg.mxu0
    %236 = vrot.lane.b32.xlu0 %v154, 96
    %v237 = vpop.permute.xlu0 %236
    %v238 = vsel %vm160, %v154, 0
    %v240 = vsel %vm160, %v237, 0
    %242 = vmatprep.subr.mxu0 0.0
    %243 = vmatpush1.xpose.msra.mxu0 %v240
    %244 = vmatprep.subr.mxu0 0.0
    %245 = vmatpush1.xpose.msra.mxu0 0.0
    %246 = vmatprep.subr.mxu0 0.0
    %247 = vmatpush1.xpose.msra.mxu0 0.0
    %248 = vmatprep.subr.mxu0 0.0
    %249 = vmatpush1.xpose.msra.mxu0 0.0
    %250 = vmatprep.subr.mxu0 0.0
    %251 = vmatpush1.xpose.msra.mxu0 0.0
    %252 = vmatprep.subr.mxu0 0.0
    %253 = vmatpush1.xpose.msra.mxu0 0.0
    %254 = vmatprep.subr.mxu0 0.0
    %255 = vmatpush1.xpose.msra.mxu0 0.0
    %256 = vmatprep.subr.mxu0 0.0
    %257 = vmatpush1.xpose.msra.mxu0 0.0
    %258 = vmatprep.subr.mxu0 0.0
    %259 = vmatpush1.xpose.msra.mxu0 0.0
    %260 = vmatprep.subr.mxu0 0.0
    %261 = vmatpush1.xpose.msra.mxu0 0.0
    %262 = vmatprep.subr.mxu0 0.0
    %263 = vmatpush1.xpose.msra.mxu0 0.0
    %264 = vmatprep.subr.mxu0 0.0
    %265 = vmatpush1.xpose.msra.mxu0 0.0
    %266 = vmatprep.subr.mxu0 0.0
    %267 = vmatpush1.xpose.msra.mxu0 0.0
    %268 = vmatprep.subr.mxu0 0.0
    %269 = vmatpush1.xpose.msra.mxu0 0.0
    %270 = vmatprep.subr.mxu0 0.0
    %271 = vmatpush1.xpose.msra.mxu0 0.0
    %272 = vmatprep.subr.mxu0 0.0
    %273 = vmatpush1.xpose.msra.mxu0 0.0
    %274 = vmatprep.subr.mxu0 0.0
    %275 = vmatpush1.xpose.msra.mxu0 0.0
    %276 = vmatprep.subr.mxu0 0.0
    %277 = vmatpush1.xpose.msra.mxu0 0.0
    %278 = vmatprep.subr.mxu0 0.0
    %279 = vmatpush1.xpose.msra.mxu0 0.0
    %280 = vmatprep.subr.mxu0 0.0
    %281 = vmatpush1.xpose.msra.mxu0 0.0
    %282 = vmatprep.subr.mxu0 0.0
    %283 = vmatpush1.xpose.msra.mxu0 0.0
    %284 = vmatprep.subr.mxu0 0.0
    %285 = vmatpush1.xpose.msra.mxu0 0.0
    %286 = vmatprep.subr.mxu0 0.0
    %287 = vmatpush1.xpose.msra.mxu0 0.0
    %288 = vmatprep.subr.mxu0 0.0
    %289 = vmatpush1.xpose.msra.mxu0 0.0
    %290 = vmatprep.subr.mxu0 0.0
    %291 = vmatpush1.xpose.msra.mxu0 0.0
    %292 = vmatprep.subr.mxu0 0.0
    %293 = vmatpush1.xpose.msra.mxu0 0.0
    %294 = vmatprep.subr.mxu0 0.0
    %295 = vmatpush1.xpose.msra.mxu0 0.0
    %296 = vmatprep.subr.mxu0 0.0
    %297 = vmatpush1.xpose.msra.mxu0 0.0
    %298 = vmatprep.subr.mxu0 0.0
    %299 = vmatpush1.xpose.msra.mxu0 0.0
    %300 = vmatprep.subr.mxu0 0.0
    %301 = vmatpush1.xpose.msra.mxu0 0.0
    %302 = vmatprep.subr.mxu0 0.0
    %303 = vmatpush1.xpose.msra.mxu0 0.0
    %304 = vmatprep.subr.mxu0 0.0
    %305 = vmatpush1.xpose.msra.mxu0 0.0
    %306 = vmatprep.mubr.f32.mxu0 0.0
    %307 = vmatmul.mubr.f32.gmra.mrb[0].mxu0 %v238
    %v308 = vpop.f32.mrb[0].mxu0
    %v309 = vadd.f32 0.0, %v308
    %v310 = vpop.f32.mrb[0].mxu0
    %311 = vdwg.mxu0
    %v312 = vsel %vm160, %v232, -inf
    %313 = vmax.xlane.f32.xlu0 %v312
    %v314 = vpop.xlane.xlu0 %313
    %v315 = vsel %vm160, %v309, -inf
    %316 = vmax.xlane.f32.xlu0 %v315
    %v317 = vpop.xlane.xlu0 %316
    %v318 = vsub.f32 %v232, %v314
    %v319 = vsub.f32 %v309, %v317
    %v320 = vmul.f32 %v318, 1.442695
    %v321 = vpow.pop %v320
    %v322 = vmul.f32 %v319, 1.442695
    %v323 = vpow.pop %v322
    %v324 = vsel %vm160, %v321, 0.0
    %325 = vadd.xlane.f32.xlu0 %v324
    %v326 = vpop.xlane.xlu0 %325
    %v327 = vsel %vm160, %v323, 0.0
    %328 = vadd.xlane.f32.xlu0 %v327
    %v329 = vpop.xlane.xlu0 %328
    %v330 = vrcp.pop %v326
    %v331 = vrcp.pop %v329
    %332 = vrot.lane.b32.xlu0 %v149, 64
    %v333 = vpop.permute.xlu0 %332
    %v336 = vsel %vm160, %v321, 0
    %338 = vmatprep.subr.mxu0 0.0
    %339 = vmatpush1.msra.mxu0 %v333
    %340 = vmatprep.subr.mxu0 0.0
    %341 = vmatpush1.msra.mxu0 0.0
    %342 = vmatprep.subr.mxu0 0.0
    %343 = vmatpush1.msra.mxu0 0.0
    %344 = vmatprep.subr.mxu0 0.0
    %345 = vmatpush1.msra.mxu0 0.0
    %346 = vmatprep.subr.mxu0 0.0
    %347 = vmatpush1.msra.mxu0 0.0
    %348 = vmatprep.subr.mxu0 0.0
    %349 = vmatpush1.msra.mxu0 0.0
    %350 = vmatprep.subr.mxu0 0.0
    %351 = vmatpush1.msra.mxu0 0.0
    %352 = vmatprep.subr.mxu0 0.0
    %353 = vmatpush1.msra.mxu0 0.0
    %354 = vmatprep.subr.mxu0 0.0
    %355 = vmatpush1.msra.mxu0 0.0
    %356 = vmatprep.subr.mxu0 0.0
    %357 = vmatpush1.msra.mxu0 0.0
    %358 = vmatprep.subr.mxu0 0.0
    %359 = vmatpush1.msra.mxu0 0.0
    %360 = vmatprep.subr.mxu0 0.0
    %361 = vmatpush1.msra.mxu0 0.0
    %362 = vmatprep.subr.mxu0 0.0
    %363 = vmatpush1.msra.mxu0 0.0
    %364 = vmatprep.subr.mxu0 0.0
    %365 = vmatpush1.msra.mxu0 0.0
    %366 = vmatprep.subr.mxu0 0.0
    %367 = vmatpush1.msra.mxu0 0.0
    %368 = vmatprep.subr.mxu0 0.0
    %369 = vmatpush1.msra.mxu0 0.0
    %370 = vmatprep.subr.mxu0 0.0
    %371 = vmatpush1.msra.mxu0 0.0
    %372 = vmatprep.subr.mxu0 0.0
    %373 = vmatpush1.msra.mxu0 0.0
    %374 = vmatprep.subr.mxu0 0.0
    %375 = vmatpush1.msra.mxu0 0.0
    %376 = vmatprep.subr.mxu0 0.0
    %377 = vmatpush1.msra.mxu0 0.0
    %378 = vmatprep.subr.mxu0 0.0
    %379 = vmatpush1.msra.mxu0 0.0
    %380 = vmatprep.subr.mxu0 0.0
    %381 = vmatpush1.msra.mxu0 0.0
    %382 = vmatprep.subr.mxu0 0.0
    %383 = vmatpush1.msra.mxu0 0.0
    %384 = vmatprep.subr.mxu0 0.0
    %385 = vmatpush1.msra.mxu0 0.0
    %386 = vmatprep.subr.mxu0 0.0
    %387 = vmatpush1.msra.mxu0 0.0
    %388 = vmatprep.subr.mxu0 0.0
    %389 = vmatpush1.msra.mxu0 0.0
    %390 = vmatprep.subr.mxu0 0.0
    %391 = vmatpush1.msra.mxu0 0.0
    %392 = vmatprep.subr.mxu0 0.0
    %393 = vmatpush1.msra.mxu0 0.0
    %394 = vmatprep.subr.mxu0 0.0
    %395 = vmatpush1.msra.mxu0 0.0
    %396 = vmatprep.subr.mxu0 0.0
    %397 = vmatpush1.msra.mxu0 0.0
    %398 = vmatprep.subr.mxu0 0.0
    %399 = vmatpush1.msra.mxu0 0.0
    %400 = vmatprep.subr.mxu0 0.0
    %401 = vmatpush1.msra.mxu0 0.0
    %402 = vmatprep.mubr.f32.mxu0 0.0
    %403 = vmatmul.mubr.f32.gmra.mrb[0].mxu0 %v336
    %v404 = vpop.f32.mrb[0].mxu0
    %v405 = vadd.f32 0.0, %v404
    %v406 = vpop.f32.mrb[0].mxu0
    %407 = vdwg.mxu0
    %408 = vrot.lane.b32.xlu0 %v154, 64
    %v409 = vpop.permute.xlu0 %408
    %v412 = vsel %vm160, %v323, 0
    %414 = vmatprep.subr.mxu0 0.0
    %415 = vmatpush1.msra.mxu0 %v409
    %416 = vmatprep.subr.mxu0 0.0
    %417 = vmatpush1.msra.mxu0 0.0
    %418 = vmatprep.subr.mxu0 0.0
    %419 = vmatpush1.msra.mxu0 0.0
    %420 = vmatprep.subr.mxu0 0.0
    %421 = vmatpush1.msra.mxu0 0.0
    %422 = vmatprep.subr.mxu0 0.0
    %423 = vmatpush1.msra.mxu0 0.0
    %424 = vmatprep.subr.mxu0 0.0
    %425 = vmatpush1.msra.mxu0 0.0
    %426 = vmatprep.subr.mxu0 0.0
    %427 = vmatpush1.msra.mxu0 0.0
    %428 = vmatprep.subr.mxu0 0.0
    %429 = vmatpush1.msra.mxu0 0.0
    %430 = vmatprep.subr.mxu0 0.0
    %431 = vmatpush1.msra.mxu0 0.0
    %432 = vmatprep.subr.mxu0 0.0
    %433 = vmatpush1.msra.mxu0 0.0
    %434 = vmatprep.subr.mxu0 0.0
    %435 = vmatpush1.msra.mxu0 0.0
    %436 = vmatprep.subr.mxu0 0.0
    %437 = vmatpush1.msra.mxu0 0.0
    %438 = vmatprep.subr.mxu0 0.0
    %439 = vmatpush1.msra.mxu0 0.0
    %440 = vmatprep.subr.mxu0 0.0
    %441 = vmatpush1.msra.mxu0 0.0
    %442 = vmatprep.subr.mxu0 0.0
    %443 = vmatpush1.msra.mxu0 0.0
    %444 = vmatprep.subr.mxu0 0.0
    %445 = vmatpush1.msra.mxu0 0.0
    %446 = vmatprep.subr.mxu0 0.0
    %447 = vmatpush1.msra.mxu0 0.0
    %448 = vmatprep.subr.mxu0 0.0
    %449 = vmatpush1.msra.mxu0 0.0
    %450 = vmatprep.subr.mxu0 0.0
    %451 = vmatpush1.msra.mxu0 0.0
    %452 = vmatprep.subr.mxu0 0.0
    %453 = vmatpush1.msra.mxu0 0.0
    %454 = vmatprep.subr.mxu0 0.0
    %455 = vmatpush1.msra.mxu0 0.0
    %456 = vmatprep.subr.mxu0 0.0
    %457 = vmatpush1.msra.mxu0 0.0
    %458 = vmatprep.subr.mxu0 0.0
    %459 = vmatpush1.msra.mxu0 0.0
    %460 = vmatprep.subr.mxu0 0.0
    %461 = vmatpush1.msra.mxu0 0.0
    %462 = vmatprep.subr.mxu0 0.0
    %463 = vmatpush1.msra.mxu0 0.0
    %464 = vmatprep.subr.mxu0 0.0
    %465 = vmatpush1.msra.mxu0 0.0
    %466 = vmatprep.subr.mxu0 0.0
    %467 = vmatpush1.msra.mxu0 0.0
    %468 = vmatprep.subr.mxu0 0.0
    %469 = vmatpush1.msra.mxu0 0.0
    %470 = vmatprep.subr.mxu0 0.0
    %471 = vmatpush1.msra.mxu0 0.0
    %472 = vmatprep.subr.mxu0 0.0
    %473 = vmatpush1.msra.mxu0 0.0
    %474 = vmatprep.subr.mxu0 0.0
    %475 = vmatpush1.msra.mxu0 0.0
    %476 = vmatprep.subr.mxu0 0.0
    %477 = vmatpush1.msra.mxu0 0.0
    %478 = vmatprep.mubr.f32.mxu0 0.0
    %479 = vmatmul.mubr.f32.gmra.mrb[0].mxu0 %v412
    %v480 = vpop.f32.mrb[0].mxu0
    %v481 = vadd.f32 0.0, %v480
    %v482 = vpop.f32.mrb[0].mxu0
    %483 = vdwg.mxu0
    %v484 = vmul.f32 %v405, %v330
    %v485 = vmul.f32 %v481, %v331
    %486 = vst.msk [vmem:[#allocation2] sm:$0xff] %vm160, %v484
    %487 = vst.msk [vmem:[#allocation2 + $0x8] sm:$0xff] %vm160, %v485
    %488 = vrot.lane.b32.xlu0 %v149, 120
    %v489 = vpop.permute.xlu0 %488
    %490 = vrot.lane.b32.xlu0 %v149, 88
    %v491 = vpop.permute.xlu0 %490
    %v492 = vsel %vm160, %v489, 0
    %v494 = vsel %vm160, %v491, 0
    %496 = vmatprep.subr.mxu0 0.0
    %497 = vmatpush1.xpose.msra.mxu0 %v494
    %498 = vmatprep.subr.mxu0 0.0
    %499 = vmatpush1.xpose.msra.mxu0 0.0
    %500 = vmatprep.subr.mxu0 0.0
    %501 = vmatpush1.xpose.msra.mxu0 0.0
    %502 = vmatprep.subr.mxu0 0.0
    %503 = vmatpush1.xpose.msra.mxu0 0.0
    %504 = vmatprep.subr.mxu0 0.0
    %505 = vmatpush1.xpose.msra.mxu0 0.0
    %506 = vmatprep.subr.mxu0 0.0
    %507 = vmatpush1.xpose.msra.mxu0 0.0
    %508 = vmatprep.subr.mxu0 0.0
    %509 = vmatpush1.xpose.msra.mxu0 0.0
    %510 = vmatprep.subr.mxu0 0.0
    %511 = vmatpush1.xpose.msra.mxu0 0.0
    %512 = vmatprep.subr.mxu0 0.0
    %513 = vmatpush1.xpose.msra.mxu0 0.0
    %514 = vmatprep.subr.mxu0 0.0
    %515 = vmatpush1.xpose.msra.mxu0 0.0
    %516 = vmatprep.subr.mxu0 0.0
    %517 = vmatpush1.xpose.msra.mxu0 0.0
    %518 = vmatprep.subr.mxu0 0.0
    %519 = vmatpush1.xpose.msra.mxu0 0.0
    %520 = vmatprep.subr.mxu0 0.0
    %521 = vmatpush1.xpose.msra.mxu0 0.0
    %522 = vmatprep.subr.mxu0 0.0
    %523 = vmatpush1.xpose.msra.mxu0 0.0
    %524 = vmatprep.subr.mxu0 0.0
    %525 = vmatpush1.xpose.msra.mxu0 0.0
    %526 = vmatprep.subr.mxu0 0.0
    %527 = vmatpush1.xpose.msra.mxu0 0.0
    %528 = vmatprep.subr.mxu0 0.0
    %529 = vmatpush1.xpose.msra.mxu0 0.0
    %530 = vmatprep.subr.mxu0 0.0
    %531 = vmatpush1.xpose.msra.mxu0 0.0
    %532 = vmatprep.subr.mxu0 0.0
    %533 = vmatpush1.xpose.msra.mxu0 0.0
    %534 = vmatprep.subr.mxu0 0.0
    %535 = vmatpush1.xpose.msra.mxu0 0.0
    %536 = vmatprep.subr.mxu0 0.0
    %537 = vmatpush1.xpose.msra.mxu0 0.0
    %538 = vmatprep.subr.mxu0 0.0
    %539 = vmatpush1.xpose.msra.mxu0 0.0
    %540 = vmatprep.subr.mxu0 0.0
    %541 = vmatpush1.xpose.msra.mxu0 0.0
    %542 = vmatprep.subr.mxu0 0.0
    %543 = vmatpush1.xpose.msra.mxu0 0.0
    %544 = vmatprep.subr.mxu0 0.0
    %545 = vmatpush1.xpose.msra.mxu0 0.0
    %546 = vmatprep.subr.mxu0 0.0
    %547 = vmatpush1.xpose.msra.mxu0 0.0
    %548 = vmatprep.subr.mxu0 0.0
    %549 = vmatpush1.xpose.msra.mxu0 0.0
    %550 = vmatprep.subr.mxu0 0.0
    %551 = vmatpush1.xpose.msra.mxu0 0.0
    %552 = vmatprep.subr.mxu0 0.0
    %553 = vmatpush1.xpose.msra.mxu0 0.0
    %554 = vmatprep.subr.mxu0 0.0
    %555 = vmatpush1.xpose.msra.mxu0 0.0
    %556 = vmatprep.subr.mxu0 0.0
    %557 = vmatpush1.xpose.msra.mxu0 0.0
    %558 = vmatprep.subr.mxu0 0.0
    %559 = vmatpush1.xpose.msra.mxu0 0.0
    %560 = vmatprep.mubr.f32.mxu0 0.0
    %561 = vmatmul.mubr.f32.gmra.mrb[0].mxu0 %v492
    %v562 = vpop.f32.mrb[0].mxu0
    %v563 = vadd.f32 0.0, %v562
    %v564 = vpop.f32.mrb[0].mxu0
    %565 = vdwg.mxu0
    %566 = vrot.lane.b32.xlu0 %v154, 120
    %v567 = vpop.permute.xlu0 %566
    %568 = vrot.lane.b32.xlu0 %v154, 88
    %v569 = vpop.permute.xlu0 %568
    %v570 = vsel %vm160, %v567, 0
    %v572 = vsel %vm160, %v569, 0
    %574 = vmatprep.subr.mxu0 0.0
    %575 = vmatpush1.xpose.msra.mxu0 %v572
    %576 = vmatprep.subr.mxu0 0.0
    %577 = vmatpush1.xpose.msra.mxu0 0.0
    %578 = vmatprep.subr.mxu0 0.0
    %579 = vmatpush1.xpose.msra.mxu0 0.0
    %580 = vmatprep.subr.mxu0 0.0
    %581 = vmatpush1.xpose.msra.mxu0 0.0
    %582 = vmatprep.subr.mxu0 0.0
    %583 = vmatpush1.xpose.msra.mxu0 0.0
    %584 = vmatprep.subr.mxu0 0.0
    %585 = vmatpush1.xpose.msra.mxu0 0.0
    %586 = vmatprep.subr.mxu0 0.0
    %587 = vmatpush1.xpose.msra.mxu0 0.0
    %588 = vmatprep.subr.mxu0 0.0
    %589 = vmatpush1.xpose.msra.mxu0 0.0
    %590 = vmatprep.subr.mxu0 0.0
    %591 = vmatpush1.xpose.msra.mxu0 0.0
    %592 = vmatprep.subr.mxu0 0.0
    %593 = vmatpush1.xpose.msra.mxu0 0.0
    %594 = vmatprep.subr.mxu0 0.0
    %595 = vmatpush1.xpose.msra.mxu0 0.0
    %596 = vmatprep.subr.mxu0 0.0
    %597 = vmatpush1.xpose.msra.mxu0 0.0
    %598 = vmatprep.subr.mxu0 0.0
    %599 = vmatpush1.xpose.msra.mxu0 0.0
    %600 = vmatprep.subr.mxu0 0.0
    %601 = vmatpush1.xpose.msra.mxu0 0.0
    %602 = vmatprep.subr.mxu0 0.0
    %603 = vmatpush1.xpose.msra.mxu0 0.0
    %604 = vmatprep.subr.mxu0 0.0
    %605 = vmatpush1.xpose.msra.mxu0 0.0
    %606 = vmatprep.subr.mxu0 0.0
    %607 = vmatpush1.xpose.msra.mxu0 0.0
    %608 = vmatprep.subr.mxu0 0.0
    %609 = vmatpush1.xpose.msra.mxu0 0.0
    %610 = vmatprep.subr.mxu0 0.0
    %611 = vmatpush1.xpose.msra.mxu0 0.0
    %612 = vmatprep.subr.mxu0 0.0
    %613 = vmatpush1.xpose.msra.mxu0 0.0
    %614 = vmatprep.subr.mxu0 0.0
    %615 = vmatpush1.xpose.msra.mxu0 0.0
    %616 = vmatprep.subr.mxu0 0.0
    %617 = vmatpush1.xpose.msra.mxu0 0.0
    %618 = vmatprep.subr.mxu0 0.0
    %619 = vmatpush1.xpose.msra.mxu0 0.0
    %620 = vmatprep.subr.mxu0 0.0
    %621 = vmatpush1.xpose.msra.mxu0 0.0
    %622 = vmatprep.subr.mxu0 0.0
    %623 = vmatpush1.xpose.msra.mxu0 0.0
    %624 = vmatprep.subr.mxu0 0.0
    %625 = vmatpush1.xpose.msra.mxu0 0.0
    %626 = vmatprep.subr.mxu0 0.0
    %627 = vmatpush1.xpose.msra.mxu0 0.0
    %628 = vmatprep.subr.mxu0 0.0
    %629 = vmatpush1.xpose.msra.mxu0 0.0
    %630 = vmatprep.subr.mxu0 0.0
    %631 = vmatpush1.xpose.msra.mxu0 0.0
    %632 = vmatprep.subr.mxu0 0.0
    %633 = vmatpush1.xpose.msra.mxu0 0.0
    %634 = vmatprep.subr.mxu0 0.0
    %635 = vmatpush1.xpose.msra.mxu0 0.0
    %636 = vmatprep.subr.mxu0 0.0
    %637 = vmatpush1.xpose.msra.mxu0 0.0
    %638 = vmatprep.mubr.f32.mxu0 0.0
    %639 = vmatmul.mubr.f32.gmra.mrb[0].mxu0 %v570
    %v640 = vpop.f32.mrb[0].mxu0
    %v641 = vadd.f32 0.0, %v640
    %v642 = vpop.f32.mrb[0].mxu0
    %643 = vdwg.mxu0
    %v644 = vsel %vm160, %v563, -inf
    %645 = vmax.xlane.f32.xlu0 %v644
    %v646 = vpop.xlane.xlu0 %645
    %v647 = vsel %vm160, %v641, -inf
    %648 = vmax.xlane.f32.xlu0 %v647
    %v649 = vpop.xlane.xlu0 %648
    %v650 = vsub.f32 %v563, %v646
    %v651 = vsub.f32 %v641, %v649
    %v652 = vmul.f32 %v650, 1.442695
    %v653 = vpow.pop %v652
    %v654 = vmul.f32 %v651, 1.442695
    %v655 = vpow.pop %v654
    %v656 = vsel %vm160, %v653, 0.0
    %657 = vadd.xlane.f32.xlu0 %v656
    %v658 = vpop.xlane.xlu0 %657
    %v659 = vsel %vm160, %v655, 0.0
    %660 = vadd.xlane.f32.xlu0 %v659
    %v661 = vpop.xlane.xlu0 %660
    %v662 = vrcp.pop %v658
    %v663 = vrcp.pop %v661
    %664 = vrot.lane.b32.xlu0 %v149, 56
    %v665 = vpop.permute.xlu0 %664
    %v668 = vsel %vm160, %v653, 0
    %670 = vmatprep.subr.mxu0 0.0
    %671 = vmatpush1.msra.mxu0 %v665
    %672 = vmatprep.subr.mxu0 0.0
    %673 = vmatpush1.msra.mxu0 0.0
    %674 = vmatprep.subr.mxu0 0.0
    %675 = vmatpush1.msra.mxu0 0.0
    %676 = vmatprep.subr.mxu0 0.0
    %677 = vmatpush1.msra.mxu0 0.0
    %678 = vmatprep.subr.mxu0 0.0
    %679 = vmatpush1.msra.mxu0 0.0
    %680 = vmatprep.subr.mxu0 0.0
    %681 = vmatpush1.msra.mxu0 0.0
    %682 = vmatprep.subr.mxu0 0.0
    %683 = vmatpush1.msra.mxu0 0.0
    %684 = vmatprep.subr.mxu0 0.0
    %685 = vmatpush1.msra.mxu0 0.0
    %686 = vmatprep.subr.mxu0 0.0
    %687 = vmatpush1.msra.mxu0 0.0
    %688 = vmatprep.subr.mxu0 0.0
    %689 = vmatpush1.msra.mxu0 0.0
    %690 = vmatprep.subr.mxu0 0.0
    %691 = vmatpush1.msra.mxu0 0.0
    %692 = vmatprep.subr.mxu0 0.0
    %693 = vmatpush1.msra.mxu0 0.0
    %694 = vmatprep.subr.mxu0 0.0
    %695 = vmatpush1.msra.mxu0 0.0
    %696 = vmatprep.subr.mxu0 0.0
    %697 = vmatpush1.msra.mxu0 0.0
    %698 = vmatprep.subr.mxu0 0.0
    %699 = vmatpush1.msra.mxu0 0.0
    %700 = vmatprep.subr.mxu0 0.0
    %701 = vmatpush1.msra.mxu0 0.0
    %702 = vmatprep.subr.mxu0 0.0
    %703 = vmatpush1.msra.mxu0 0.0
    %704 = vmatprep.subr.mxu0 0.0
    %705 = vmatpush1.msra.mxu0 0.0
    %706 = vmatprep.subr.mxu0 0.0
    %707 = vmatpush1.msra.mxu0 0.0
    %708 = vmatprep.subr.mxu0 0.0
    %709 = vmatpush1.msra.mxu0 0.0
    %710 = vmatprep.subr.mxu0 0.0
    %711 = vmatpush1.msra.mxu0 0.0
    %712 = vmatprep.subr.mxu0 0.0
    %713 = vmatpush1.msra.mxu0 0.0
    %714 = vmatprep.subr.mxu0 0.0
    %715 = vmatpush1.msra.mxu0 0.0
    %716 = vmatprep.subr.mxu0 0.0
    %717 = vmatpush1.msra.mxu0 0.0
    %718 = vmatprep.subr.mxu0 0.0
    %719 = vmatpush1.msra.mxu0 0.0
    %720 = vmatprep.subr.mxu0 0.0
    %721 = vmatpush1.msra.mxu0 0.0
    %722 = vmatprep.subr.mxu0 0.0
    %723 = vmatpush1.msra.mxu0 0.0
    %724 = vmatprep.subr.mxu0 0.0
    %725 = vmatpush1.msra.mxu0 0.0
    %726 = vmatprep.subr.mxu0 0.0
    %727 = vmatpush1.msra.mxu0 0.0
    %728 = vmatprep.subr.mxu0 0.0
    %729 = vmatpush1.msra.mxu0 0.0
    %730 = vmatprep.subr.mxu0 0.0
    %731 = vmatpush1.msra.mxu0 0.0
    %732 = vmatprep.subr.mxu0 0.0
    %733 = vmatpush1.msra.mxu0 0.0
    %734 = vmatprep.mubr.f32.mxu0 0.0
    %735 = vmatmul.mubr.f32.gmra.mrb[0].mxu0 %v668
    %v736 = vpop.f32.mrb[0].mxu0
    %v737 = vadd.f32 0.0, %v736
    %v738 = vpop.f32.mrb[0].mxu0
    %739 = vdwg.mxu0
    %740 = vrot.lane.b32.xlu0 %v154, 56
    %v741 = vpop.permute.xlu0 %740
    %v744 = vsel %vm160, %v655, 0
    %746 = vmatprep.subr.mxu0 0.0
    %747 = vmatpush1.msra.mxu0 %v741
    %748 = vmatprep.subr.mxu0 0.0
    %749 = vmatpush1.msra.mxu0 0.0
    %750 = vmatprep.subr.mxu0 0.0
    %751 = vmatpush1.msra.mxu0 0.0
    %752 = vmatprep.subr.mxu0 0.0
    %753 = vmatpush1.msra.mxu0 0.0
    %754 = vmatprep.subr.mxu0 0.0
    %755 = vmatpush1.msra.mxu0 0.0
    %756 = vmatprep.subr.mxu0 0.0
    %757 = vmatpush1.msra.mxu0 0.0
    %758 = vmatprep.subr.mxu0 0.0
    %759 = vmatpush1.msra.mxu0 0.0
    %760 = vmatprep.subr.mxu0 0.0
    %761 = vmatpush1.msra.mxu0 0.0
    %762 = vmatprep.subr.mxu0 0.0
    %763 = vmatpush1.msra.mxu0 0.0
    %764 = vmatprep.subr.mxu0 0.0
    %765 = vmatpush1.msra.mxu0 0.0
    %766 = vmatprep.subr.mxu0 0.0
    %767 = vmatpush1.msra.mxu0 0.0
    %768 = vmatprep.subr.mxu0 0.0
    %769 = vmatpush1.msra.mxu0 0.0
    %770 = vmatprep.subr.mxu0 0.0
    %771 = vmatpush1.msra.mxu0 0.0
    %772 = vmatprep.subr.mxu0 0.0
    %773 = vmatpush1.msra.mxu0 0.0
    %774 = vmatprep.subr.mxu0 0.0
    %775 = vmatpush1.msra.mxu0 0.0
    %776 = vmatprep.subr.mxu0 0.0
    %777 = vmatpush1.msra.mxu0 0.0
    %778 = vmatprep.subr.mxu0 0.0
    %779 = vmatpush1.msra.mxu0 0.0
    %780 = vmatprep.subr.mxu0 0.0
    %781 = vmatpush1.msra.mxu0 0.0
    %782 = vmatprep.subr.mxu0 0.0
    %783 = vmatpush1.msra.mxu0 0.0
    %784 = vmatprep.subr.mxu0 0.0
    %785 = vmatpush1.msra.mxu0 0.0
    %786 = vmatprep.subr.mxu0 0.0
    %787 = vmatpush1.msra.mxu0 0.0
    %788 = vmatprep.subr.mxu0 0.0
    %789 = vmatpush1.msra.mxu0 0.0
    %790 = vmatprep.subr.mxu0 0.0
    %791 = vmatpush1.msra.mxu0 0.0
    %792 = vmatprep.subr.mxu0 0.0
    %793 = vmatpush1.msra.mxu0 0.0
    %794 = vmatprep.subr.mxu0 0.0
    %795 = vmatpush1.msra.mxu0 0.0
    %796 = vmatprep.subr.mxu0 0.0
    %797 = vmatpush1.msra.mxu0 0.0
    %798 = vmatprep.subr.mxu0 0.0
    %799 = vmatpush1.msra.mxu0 0.0
    %800 = vmatprep.subr.mxu0 0.0
    %801 = vmatpush1.msra.mxu0 0.0
    %802 = vmatprep.subr.mxu0 0.0
    %803 = vmatpush1.msra.mxu0 0.0
    %804 = vmatprep.subr.mxu0 0.0
    %805 = vmatpush1.msra.mxu0 0.0
    %806 = vmatprep.subr.mxu0 0.0
    %807 = vmatpush1.msra.mxu0 0.0
    %808 = vmatprep.subr.mxu0 0.0
    %809 = vmatpush1.msra.mxu0 0.0
    %810 = vmatprep.mubr.f32.mxu0 0.0
    %811 = vmatmul.mubr.f32.gmra.mrb[0].mxu0 %v744
    %v812 = vpop.f32.mrb[0].mxu0
    %v813 = vadd.f32 0.0, %v812
    %v814 = vpop.f32.mrb[0].mxu0
    %815 = vdwg.mxu0
    %v816 = vmul.f32 %v737, %v662
    %v817 = vmul.f32 %v813, %v663
    %820 = vrot.lane.b32.xlu0 %v816, 8
    %v821 = vpop.permute.xlu0 %820
    %822 = vrot.lane.b32.xlu0 %v817, 8
    %v823 = vpop.permute.xlu0 %822
    %vm826 = vcmask 130112
    %827 = vst.msk [vmem:[#allocation2] sm:$0xff] %vm826, %v821
    %828 = vst.msk [vmem:[#allocation2 + $0x8] sm:$0xff] %vm826, %v823
    %829 = vrot.lane.b32.xlu0 %v149, 112
    %v830 = vpop.permute.xlu0 %829
    %831 = vrot.lane.b32.xlu0 %v149, 80
    %v832 = vpop.permute.xlu0 %831
    %v833 = vsel %vm160, %v830, 0
    %v835 = vsel %vm160, %v832, 0
    %837 = vmatprep.subr.mxu0 0.0
    %838 = vmatpush1.xpose.msra.mxu0 %v835
    %839 = vmatprep.subr.mxu0 0.0
    %840 = vmatpush1.xpose.msra.mxu0 0.0
    %841 = vmatprep.subr.mxu0 0.0
    %842 = vmatpush1.xpose.msra.mxu0 0.0
    %843 = vmatprep.subr.mxu0 0.0
    %844 = vmatpush1.xpose.msra.mxu0 0.0
    %845 = vmatprep.subr.mxu0 0.0
    %846 = vmatpush1.xpose.msra.mxu0 0.0
    %847 = vmatprep.subr.mxu0 0.0
    %848 = vmatpush1.xpose.msra.mxu0 0.0
    %849 = vmatprep.subr.mxu0 0.0
    %850 = vmatpush1.xpose.msra.mxu0 0.0
    %851 = vmatprep.subr.mxu0 0.0
    %852 = vmatpush1.xpose.msra.mxu0 0.0
    %853 = vmatprep.subr.mxu0 0.0
    %854 = vmatpush1.xpose.msra.mxu0 0.0
    %855 = vmatprep.subr.mxu0 0.0
    %856 = vmatpush1.xpose.msra.mxu0 0.0
    %857 = vmatprep.subr.mxu0 0.0
    %858 = vmatpush1.xpose.msra.mxu0 0.0
    %859 = vmatprep.subr.mxu0 0.0
    %860 = vmatpush1.xpose.msra.mxu0 0.0
    %861 = vmatprep.subr.mxu0 0.0
    %862 = vmatpush1.xpose.msra.mxu0 0.0
    %863 = vmatprep.subr.mxu0 0.0
    %864 = vmatpush1.xpose.msra.mxu0 0.0
    %865 = vmatprep.subr.mxu0 0.0
    %866 = vmatpush1.xpose.msra.mxu0 0.0
    %867 = vmatprep.subr.mxu0 0.0
    %868 = vmatpush1.xpose.msra.mxu0 0.0
    %869 = vmatprep.subr.mxu0 0.0
    %870 = vmatpush1.xpose.msra.mxu0 0.0
    %871 = vmatprep.subr.mxu0 0.0
    %872 = vmatpush1.xpose.msra.mxu0 0.0
    %873 = vmatprep.subr.mxu0 0.0
    %874 = vmatpush1.xpose.msra.mxu0 0.0
    %875 = vmatprep.subr.mxu0 0.0
    %876 = vmatpush1.xpose.msra.mxu0 0.0
    %877 = vmatprep.subr.mxu0 0.0
    %878 = vmatpush1.xpose.msra.mxu0 0.0
    %879 = vmatprep.subr.mxu0 0.0
    %880 = vmatpush1.xpose.msra.mxu0 0.0
    %881 = vmatprep.subr.mxu0 0.0
    %882 = vmatpush1.xpose.msra.mxu0 0.0
    %883 = vmatprep.subr.mxu0 0.0
    %884 = vmatpush1.xpose.msra.mxu0 0.0
    %885 = vmatprep.subr.mxu0 0.0
    %886 = vmatpush1.xpose.msra.mxu0 0.0
    %887 = vmatprep.subr.mxu0 0.0
    %888 = vmatpush1.xpose.msra.mxu0 0.0
    %889 = vmatprep.subr.mxu0 0.0
    %890 = vmatpush1.xpose.msra.mxu0 0.0
    %891 = vmatprep.subr.mxu0 0.0
    %892 = vmatpush1.xpose.msra.mxu0 0.0
    %893 = vmatprep.subr.mxu0 0.0
    %894 = vmatpush1.xpose.msra.mxu0 0.0
    %895 = vmatprep.subr.mxu0 0.0
    %896 = vmatpush1.xpose.msra.mxu0 0.0
    %897 = vmatprep.subr.mxu0 0.0
    %898 = vmatpush1.xpose.msra.mxu0 0.0
    %899 = vmatprep.subr.mxu0 0.0
    %900 = vmatpush1.xpose.msra.mxu0 0.0
    %901 = vmatprep.mubr.f32.mxu0 0.0
    %902 = vmatmul.mubr.f32.gmra.mrb[0].mxu0 %v833
    %v903 = vpop.f32.mrb[0].mxu0
    %v904 = vadd.f32 0.0, %v903
    %v905 = vpop.f32.mrb[0].mxu0
    %906 = vdwg.mxu0
    %907 = vrot.lane.b32.xlu0 %v154, 112
    %v908 = vpop.permute.xlu0 %907
    %909 = vrot.lane.b32.xlu0 %v154, 80
    %v910 = vpop.permute.xlu0 %909
    %v911 = vsel %vm160, %v908, 0
    %v913 = vsel %vm160, %v910, 0
    %915 = vmatprep.subr.mxu0 0.0
    %916 = vmatpush1.xpose.msra.mxu0 %v913
    %917 = vmatprep.subr.mxu0 0.0
    %918 = vmatpush1.xpose.msra.mxu0 0.0
    %919 = vmatprep.subr.mxu0 0.0
    %920 = vmatpush1.xpose.msra.mxu0 0.0
    %921 = vmatprep.subr.mxu0 0.0
    %922 = vmatpush1.xpose.msra.mxu0 0.0
    %923 = vmatprep.subr.mxu0 0.0
    %924 = vmatpush1.xpose.msra.mxu0 0.0
    %925 = vmatprep.subr.mxu0 0.0
    %926 = vmatpush1.xpose.msra.mxu0 0.0
    %927 = vmatprep.subr.mxu0 0.0
    %928 = vmatpush1.xpose.msra.mxu0 0.0
    %929 = vmatprep.subr.mxu0 0.0
    %930 = vmatpush1.xpose.msra.mxu0 0.0
    %931 = vmatprep.subr.mxu0 0.0
    %932 = vmatpush1.xpose.msra.mxu0 0.0
    %933 = vmatprep.subr.mxu0 0.0
    %934 = vmatpush1.xpose.msra.mxu0 0.0
    %935 = vmatprep.subr.mxu0 0.0
    %936 = vmatpush1.xpose.msra.mxu0 0.0
    %937 = vmatprep.subr.mxu0 0.0
    %938 = vmatpush1.xpose.msra.mxu0 0.0
    %939 = vmatprep.subr.mxu0 0.0
    %940 = vmatpush1.xpose.msra.mxu0 0.0
    %941 = vmatprep.subr.mxu0 0.0
    %942 = vmatpush1.xpose.msra.mxu0 0.0
    %943 = vmatprep.subr.mxu0 0.0
    %944 = vmatpush1.xpose.msra.mxu0 0.0
    %945 = vmatprep.subr.mxu0 0.0
    %946 = vmatpush1.xpose.msra.mxu0 0.0
    %947 = vmatprep.subr.mxu0 0.0
    %948 = vmatpush1.xpose.msra.mxu0 0.0
    %949 = vmatprep.subr.mxu0 0.0
    %950 = vmatpush1.xpose.msra.mxu0 0.0
    %951 = vmatprep.subr.mxu0 0.0
    %952 = vmatpush1.xpose.msra.mxu0 0.0
    %953 = vmatprep.subr.mxu0 0.0
    %954 = vmatpush1.xpose.msra.mxu0 0.0
    %955 = vmatprep.subr.mxu0 0.0
    %956 = vmatpush1.xpose.msra.mxu0 0.0
    %957 = vmatprep.subr.mxu0 0.0
    %958 = vmatpush1.xpose.msra.mxu0 0.0
    %959 = vmatprep.subr.mxu0 0.0
    %960 = vmatpush1.xpose.msra.mxu0 0.0
    %961 = vmatprep.subr.mxu0 0.0
    %962 = vmatpush1.xpose.msra.mxu0 0.0
    %963 = vmatprep.subr.mxu0 0.0
    %964 = vmatpush1.xpose.msra.mxu0 0.0
    %965 = vmatprep.subr.mxu0 0.0
    %966 = vmatpush1.xpose.msra.mxu0 0.0
    %967 = vmatprep.subr.mxu0 0.0
    %968 = vmatpush1.xpose.msra.mxu0 0.0
    %969 = vmatprep.subr.mxu0 0.0
    %970 = vmatpush1.xpose.msra.mxu0 0.0
    %971 = vmatprep.subr.mxu0 0.0
    %972 = vmatpush1.xpose.msra.mxu0 0.0
    %973 = vmatprep.subr.mxu0 0.0
    %974 = vmatpush1.xpose.msra.mxu0 0.0
    %975 = vmatprep.subr.mxu0 0.0
    %976 = vmatpush1.xpose.msra.mxu0 0.0
    %977 = vmatprep.subr.mxu0 0.0
    %978 = vmatpush1.xpose.msra.mxu0 0.0
    %979 = vmatprep.mubr.f32.mxu0 0.0
    %980 = vmatmul.mubr.f32.gmra.mrb[0].mxu0 %v911
    %v981 = vpop.f32.mrb[0].mxu0
    %v982 = vadd.f32 0.0, %v981
    %v983 = vpop.f32.mrb[0].mxu0
    %984 = vdwg.mxu0
    %v985 = vsel %vm160, %v904, -inf
    %986 = vmax.xlane.f32.xlu0 %v985
    %v987 = vpop.xlane.xlu0 %986
    %v988 = vsel %vm160, %v982, -inf
    %989 = vmax.xlane.f32.xlu0 %v988
    %v990 = vpop.xlane.xlu0 %989
    %v991 = vsub.f32 %v904, %v987
    %v992 = vsub.f32 %v982, %v990
    %v993 = vmul.f32 %v991, 1.442695
    %v994 = vpow.pop %v993
    %v995 = vmul.f32 %v992, 1.442695
    %v996 = vpow.pop %v995
    %v997 = vsel %vm160, %v994, 0.0
    %998 = vadd.xlane.f32.xlu0 %v997
    %v999 = vpop.xlane.xlu0 %998
    %v1000 = vsel %vm160, %v996, 0.0
    %1001 = vadd.xlane.f32.xlu0 %v1000
    %v1002 = vpop.xlane.xlu0 %1001
    %v1003 = vrcp.pop %v999
    %v1004 = vrcp.pop %v1002
    %1005 = vrot.lane.b32.xlu0 %v149, 48
    %v1006 = vpop.permute.xlu0 %1005
    %v1009 = vsel %vm160, %v994, 0
    %1011 = vmatprep.subr.mxu0 0.0
    %1012 = vmatpush1.msra.mxu0 %v1006
    %1013 = vmatprep.subr.mxu0 0.0
    %1014 = vmatpush1.msra.mxu0 0.0
    %1015 = vmatprep.subr.mxu0 0.0
    %1016 = vmatpush1.msra.mxu0 0.0
    %1017 = vmatprep.subr.mxu0 0.0
    %1018 = vmatpush1.msra.mxu0 0.0
    %1019 = vmatprep.subr.mxu0 0.0
    %1020 = vmatpush1.msra.mxu0 0.0
    %1021 = vmatprep.subr.mxu0 0.0
    %1022 = vmatpush1.msra.mxu0 0.0
    %1023 = vmatprep.subr.mxu0 0.0
    %1024 = vmatpush1.msra.mxu0 0.0
    %1025 = vmatprep.subr.mxu0 0.0
    %1026 = vmatpush1.msra.mxu0 0.0
    %1027 = vmatprep.subr.mxu0 0.0
    %1028 = vmatpush1.msra.mxu0 0.0
    %1029 = vmatprep.subr.mxu0 0.0
    %1030 = vmatpush1.msra.mxu0 0.0
    %1031 = vmatprep.subr.mxu0 0.0
    %1032 = vmatpush1.msra.mxu0 0.0
    %1033 = vmatprep.subr.mxu0 0.0
    %1034 = vmatpush1.msra.mxu0 0.0
    %1035 = vmatprep.subr.mxu0 0.0
    %1036 = vmatpush1.msra.mxu0 0.0
    %1037 = vmatprep.subr.mxu0 0.0
    %1038 = vmatpush1.msra.mxu0 0.0
    %1039 = vmatprep.subr.mxu0 0.0
    %1040 = vmatpush1.msra.mxu0 0.0
    %1041 = vmatprep.subr.mxu0 0.0
    %1042 = vmatpush1.msra.mxu0 0.0
    %1043 = vmatprep.subr.mxu0 0.0
    %1044 = vmatpush1.msra.mxu0 0.0
    %1045 = vmatprep.subr.mxu0 0.0
    %1046 = vmatpush1.msra.mxu0 0.0
    %1047 = vmatprep.subr.mxu0 0.0
    %1048 = vmatpush1.msra.mxu0 0.0
    %1049 = vmatprep.subr.mxu0 0.0
    %1050 = vmatpush1.msra.mxu0 0.0
    %1051 = vmatprep.subr.mxu0 0.0
    %1052 = vmatpush1.msra.mxu0 0.0
    %1053 = vmatprep.subr.mxu0 0.0
    %1054 = vmatpush1.msra.mxu0 0.0
    %1055 = vmatprep.subr.mxu0 0.0
    %1056 = vmatpush1.msra.mxu0 0.0
    %1057 = vmatprep.subr.mxu0 0.0
    %1058 = vmatpush1.msra.mxu0 0.0
    %1059 = vmatprep.subr.mxu0 0.0
    %1060 = vmatpush1.msra.mxu0 0.0
    %1061 = vmatprep.subr.mxu0 0.0
    %1062 = vmatpush1.msra.mxu0 0.0
    %1063 = vmatprep.subr.mxu0 0.0
    %1064 = vmatpush1.msra.mxu0 0.0
    %1065 = vmatprep.subr.mxu0 0.0
    %1066 = vmatpush1.msra.mxu0 0.0
    %1067 = vmatprep.subr.mxu0 0.0
    %1068 = vmatpush1.msra.mxu0 0.0
    %1069 = vmatprep.subr.mxu0 0.0
    %1070 = vmatpush1.msra.mxu0 0.0
    %1071 = vmatprep.subr.mxu0 0.0
    %1072 = vmatpush1.msra.mxu0 0.0
    %1073 = vmatprep.subr.mxu0 0.0
    %1074 = vmatpush1.msra.mxu0 0.0
    %1075 = vmatprep.mubr.f32.mxu0 0.0
    %1076 = vmatmul.mubr.f32.gmra.mrb[0].mxu0 %v1009
    %v1077 = vpop.f32.mrb[0].mxu0
    %v1078 = vadd.f32 0.0, %v1077
    %v1079 = vpop.f32.mrb[0].mxu0
    %1080 = vdwg.mxu0
    %1081 = vrot.lane.b32.xlu0 %v154, 48
    %v1082 = vpop.permute.xlu0 %1081
    %v1085 = vsel %vm160, %v996, 0
    %1087 = vmatprep.subr.mxu0 0.0
    %1088 = vmatpush1.msra.mxu0 %v1082
    %1089 = vmatprep.subr.mxu0 0.0
    %1090 = vmatpush1.msra.mxu0 0.0
    %1091 = vmatprep.subr.mxu0 0.0
    %1092 = vmatpush1.msra.mxu0 0.0
    %1093 = vmatprep.subr.mxu0 0.0
    %1094 = vmatpush1.msra.mxu0 0.0
    %1095 = vmatprep.subr.mxu0 0.0
    %1096 = vmatpush1.msra.mxu0 0.0
    %1097 = vmatprep.subr.mxu0 0.0
    %1098 = vmatpush1.msra.mxu0 0.0
    %1099 = vmatprep.subr.mxu0 0.0
    %1100 = vmatpush1.msra.mxu0 0.0
    %1101 = vmatprep.subr.mxu0 0.0
    %1102 = vmatpush1.msra.mxu0 0.0
    %1103 = vmatprep.subr.mxu0 0.0
    %1104 = vmatpush1.msra.mxu0 0.0
    %1105 = vmatprep.subr.mxu0 0.0
    %1106 = vmatpush1.msra.mxu0 0.0
    %1107 = vmatprep.subr.mxu0 0.0
    %1108 = vmatpush1.msra.mxu0 0.0
    %1109 = vmatprep.subr.mxu0 0.0
    %1110 = vmatpush1.msra.mxu0 0.0
    %1111 = vmatprep.subr.mxu0 0.0
    %1112 = vmatpush1.msra.mxu0 0.0
    %1113 = vmatprep.subr.mxu0 0.0
    %1114 = vmatpush1.msra.mxu0 0.0
    %1115 = vmatprep.subr.mxu0 0.0
    %1116 = vmatpush1.msra.mxu0 0.0
    %1117 = vmatprep.subr.mxu0 0.0
    %1118 = vmatpush1.msra.mxu0 0.0
    %1119 = vmatprep.subr.mxu0 0.0
    %1120 = vmatpush1.msra.mxu0 0.0
    %1121 = vmatprep.subr.mxu0 0.0
    %1122 = vmatpush1.msra.mxu0 0.0
    %1123 = vmatprep.subr.mxu0 0.0
    %1124 = vmatpush1.msra.mxu0 0.0
    %1125 = vmatprep.subr.mxu0 0.0
    %1126 = vmatpush1.msra.mxu0 0.0
    %1127 = vmatprep.subr.mxu0 0.0
    %1128 = vmatpush1.msra.mxu0 0.0
    %1129 = vmatprep.subr.mxu0 0.0
    %1130 = vmatpush1.msra.mxu0 0.0
    %1131 = vmatprep.subr.mxu0 0.0
    %1132 = vmatpush1.msra.mxu0 0.0
    %1133 = vmatprep.subr.mxu0 0.0
    %1134 = vmatpush1.msra.mxu0 0.0
    %1135 = vmatprep.subr.mxu0 0.0
    %1136 = vmatpush1.msra.mxu0 0.0
    %1137 = vmatprep.subr.mxu0 0.0
    %1138 = vmatpush1.msra.mxu0 0.0
    %1139 = vmatprep.subr.mxu0 0.0
    %1140 = vmatpush1.msra.mxu0 0.0
    %1141 = vmatprep.subr.mxu0 0.0
    %1142 = vmatpush1.msra.mxu0 0.0
    %1143 = vmatprep.subr.mxu0 0.0
    %1144 = vmatpush1.msra.mxu0 0.0
    %1145 = vmatprep.subr.mxu0 0.0
    %1146 = vmatpush1.msra.mxu0 0.0
    %1147 = vmatprep.subr.mxu0 0.0
    %1148 = vmatpush1.msra.mxu0 0.0
    %1149 = vmatprep.subr.mxu0 0.0
    %1150 = vmatpush1.msra.mxu0 0.0
    %1151 = vmatprep.mubr.f32.mxu0 0.0
    %1152 = vmatmul.mubr.f32.gmra.mrb[0].mxu0 %v1085
    %v1153 = vpop.f32.mrb[0].mxu0
    %v1154 = vadd.f32 0.0, %v1153
    %v1155 = vpop.f32.mrb[0].mxu0
    %1156 = vdwg.mxu0
    %v1157 = vmul.f32 %v1078, %v1003
    %v1158 = vmul.f32 %v1154, %v1004
    %1161 = vrot.lane.b32.xlu0 %v1157, 16
    %v1162 = vpop.permute.xlu0 %1161
    %1163 = vrot.lane.b32.xlu0 %v1158, 16
    %v1164 = vpop.permute.xlu0 %1163
    %vm1167 = vcmask 195712
    %1168 = vst.msk [vmem:[#allocation2] sm:$0xff] %vm1167, %v1162
    %1169 = vst.msk [vmem:[#allocation2 + $0x8] sm:$0xff] %vm1167, %v1164
    %1170 = vrot.lane.b32.xlu0 %v149, 104
    %v1171 = vpop.permute.xlu0 %1170
    %1172 = vrot.lane.b32.xlu0 %v149, 72
    %v1173 = vpop.permute.xlu0 %1172
    %v1174 = vsel %vm160, %v1171, 0
    %v1176 = vsel %vm160, %v1173, 0
    %1178 = vmatprep.subr.mxu0 0.0
    %1179 = vmatpush1.xpose.msra.mxu0 %v1176
    %1180 = vmatprep.subr.mxu0 0.0
    %1181 = vmatpush1.xpose.msra.mxu0 0.0
    %1182 = vmatprep.subr.mxu0 0.0
    %1183 = vmatpush1.xpose.msra.mxu0 0.0
    %1184 = vmatprep.subr.mxu0 0.0
    %1185 = vmatpush1.xpose.msra.mxu0 0.0
    %1186 = vmatprep.subr.mxu0 0.0
    %1187 = vmatpush1.xpose.msra.mxu0 0.0
    %1188 = vmatprep.subr.mxu0 0.0
    %1189 = vmatpush1.xpose.msra.mxu0 0.0
    %1190 = vmatprep.subr.mxu0 0.0
    %1191 = vmatpush1.xpose.msra.mxu0 0.0
    %1192 = vmatprep.subr.mxu0 0.0
    %1193 = vmatpush1.xpose.msra.mxu0 0.0
    %1194 = vmatprep.subr.mxu0 0.0
    %1195 = vmatpush1.xpose.msra.mxu0 0.0
    %1196 = vmatprep.subr.mxu0 0.0
    %1197 = vmatpush1.xpose.msra.mxu0 0.0
    %1198 = vmatprep.subr.mxu0 0.0
    %1199 = vmatpush1.xpose.msra.mxu0 0.0
    %1200 = vmatprep.subr.mxu0 0.0
    %1201 = vmatpush1.xpose.msra.mxu0 0.0
    %1202 = vmatprep.subr.mxu0 0.0
    %1203 = vmatpush1.xpose.msra.mxu0 0.0
    %1204 = vmatprep.subr.mxu0 0.0
    %1205 = vmatpush1.xpose.msra.mxu0 0.0
    %1206 = vmatprep.subr.mxu0 0.0
    %1207 = vmatpush1.xpose.msra.mxu0 0.0
    %1208 = vmatprep.subr.mxu0 0.0
    %1209 = vmatpush1.xpose.msra.mxu0 0.0
    %1210 = vmatprep.subr.mxu0 0.0
    %1211 = vmatpush1.xpose.msra.mxu0 0.0
    %1212 = vmatprep.subr.mxu0 0.0
    %1213 = vmatpush1.xpose.msra.mxu0 0.0
    %1214 = vmatprep.subr.mxu0 0.0
    %1215 = vmatpush1.xpose.msra.mxu0 0.0
    %1216 = vmatprep.subr.mxu0 0.0
    %1217 = vmatpush1.xpose.msra.mxu0 0.0
    %1218 = vmatprep.subr.mxu0 0.0
    %1219 = vmatpush1.xpose.msra.mxu0 0.0
    %1220 = vmatprep.subr.mxu0 0.0
    %1221 = vmatpush1.xpose.msra.mxu0 0.0
    %1222 = vmatprep.subr.mxu0 0.0
    %1223 = vmatpush1.xpose.msra.mxu0 0.0
    %1224 = vmatprep.subr.mxu0 0.0
    %1225 = vmatpush1.xpose.msra.mxu0 0.0
    %1226 = vmatprep.subr.mxu0 0.0
    %1227 = vmatpush1.xpose.msra.mxu0 0.0
    %1228 = vmatprep.subr.mxu0 0.0
    %1229 = vmatpush1.xpose.msra.mxu0 0.0
    %1230 = vmatprep.subr.mxu0 0.0
    %1231 = vmatpush1.xpose.msra.mxu0 0.0
    %1232 = vmatprep.subr.mxu0 0.0
    %1233 = vmatpush1.xpose.msra.mxu0 0.0
    %1234 = vmatprep.subr.mxu0 0.0
    %1235 = vmatpush1.xpose.msra.mxu0 0.0
    %1236 = vmatprep.subr.mxu0 0.0
    %1237 = vmatpush1.xpose.msra.mxu0 0.0
    %1238 = vmatprep.subr.mxu0 0.0
    %1239 = vmatpush1.xpose.msra.mxu0 0.0
    %1240 = vmatprep.subr.mxu0 0.0
    %1241 = vmatpush1.xpose.msra.mxu0 0.0
    %1242 = vmatprep.mubr.f32.mxu0 0.0
    %1243 = vmatmul.mubr.f32.gmra.mrb[0].mxu0 %v1174
    %v1244 = vpop.f32.mrb[0].mxu0
    %v1245 = vadd.f32 0.0, %v1244
    %v1246 = vpop.f32.mrb[0].mxu0
    %1247 = vdwg.mxu0
    %1248 = vrot.lane.b32.xlu0 %v154, 104
    %v1249 = vpop.permute.xlu0 %1248
    %1250 = vrot.lane.b32.xlu0 %v154, 72
    %v1251 = vpop.permute.xlu0 %1250
    %v1252 = vsel %vm160, %v1249, 0
    %v1254 = vsel %vm160, %v1251, 0
    %1256 = vmatprep.subr.mxu0 0.0
    %1257 = vmatpush1.xpose.msra.mxu0 %v1254
    %1258 = vmatprep.subr.mxu0 0.0
    %1259 = vmatpush1.xpose.msra.mxu0 0.0
    %1260 = vmatprep.subr.mxu0 0.0
    %1261 = vmatpush1.xpose.msra.mxu0 0.0
    %1262 = vmatprep.subr.mxu0 0.0
    %1263 = vmatpush1.xpose.msra.mxu0 0.0
    %1264 = vmatprep.subr.mxu0 0.0
    %1265 = vmatpush1.xpose.msra.mxu0 0.0
    %1266 = vmatprep.subr.mxu0 0.0
    %1267 = vmatpush1.xpose.msra.mxu0 0.0
    %1268 = vmatprep.subr.mxu0 0.0
    %1269 = vmatpush1.xpose.msra.mxu0 0.0
    %1270 = vmatprep.subr.mxu0 0.0
    %1271 = vmatpush1.xpose.msra.mxu0 0.0
    %1272 = vmatprep.subr.mxu0 0.0
    %1273 = vmatpush1.xpose.msra.mxu0 0.0
    %1274 = vmatprep.subr.mxu0 0.0
    %1275 = vmatpush1.xpose.msra.mxu0 0.0
    %1276 = vmatprep.subr.mxu0 0.0
    %1277 = vmatpush1.xpose.msra.mxu0 0.0
    %1278 = vmatprep.subr.mxu0 0.0
    %1279 = vmatpush1.xpose.msra.mxu0 0.0
    %1280 = vmatprep.subr.mxu0 0.0
    %1281 = vmatpush1.xpose.msra.mxu0 0.0
    %1282 = vmatprep.subr.mxu0 0.0
    %1283 = vmatpush1.xpose.msra.mxu0 0.0
    %1284 = vmatprep.subr.mxu0 0.0
    %1285 = vmatpush1.xpose.msra.mxu0 0.0
    %1286 = vmatprep.subr.mxu0 0.0
    %1287 = vmatpush1.xpose.msra.mxu0 0.0
    %1288 = vmatprep.subr.mxu0 0.0
    %1289 = vmatpush1.xpose.msra.mxu0 0.0
    %1290 = vmatprep.subr.mxu0 0.0
    %1291 = vmatpush1.xpose.msra.mxu0 0.0
    %1292 = vmatprep.subr.mxu0 0.0
    %1293 = vmatpush1.xpose.msra.mxu0 0.0
    %1294 = vmatprep.subr.mxu0 0.0
    %1295 = vmatpush1.xpose.msra.mxu0 0.0
    %1296 = vmatprep.subr.mxu0 0.0
    %1297 = vmatpush1.xpose.msra.mxu0 0.0
    %1298 = vmatprep.subr.mxu0 0.0
    %1299 = vmatpush1.xpose.msra.mxu0 0.0
    %1300 = vmatprep.subr.mxu0 0.0
    %1301 = vmatpush1.xpose.msra.mxu0 0.0
    %1302 = vmatprep.subr.mxu0 0.0
    %1303 = vmatpush1.xpose.msra.mxu0 0.0
    %1304 = vmatprep.subr.mxu0 0.0
    %1305 = vmatpush1.xpose.msra.mxu0 0.0
    %1306 = vmatprep.subr.mxu0 0.0
    %1307 = vmatpush1.xpose.msra.mxu0 0.0
    %1308 = vmatprep.subr.mxu0 0.0
    %1309 = vmatpush1.xpose.msra.mxu0 0.0
    %1310 = vmatprep.subr.mxu0 0.0
    %1311 = vmatpush1.xpose.msra.mxu0 0.0
    %1312 = vmatprep.subr.mxu0 0.0
    %1313 = vmatpush1.xpose.msra.mxu0 0.0
    %1314 = vmatprep.subr.mxu0 0.0
    %1315 = vmatpush1.xpose.msra.mxu0 0.0
    %1316 = vmatprep.subr.mxu0 0.0
    %1317 = vmatpush1.xpose.msra.mxu0 0.0
    %1318 = vmatprep.subr.mxu0 0.0
    %1319 = vmatpush1.xpose.msra.mxu0 0.0
    %1320 = vmatprep.mubr.f32.mxu0 0.0
    %1321 = vmatmul.mubr.f32.gmra.mrb[0].mxu0 %v1252
    %v1322 = vpop.f32.mrb[0].mxu0
    %v1323 = vadd.f32 0.0, %v1322
    %v1324 = vpop.f32.mrb[0].mxu0
    %1325 = vdwg.mxu0
    %v1326 = vsel %vm160, %v1245, -inf
    %1327 = vmax.xlane.f32.xlu0 %v1326
    %v1328 = vpop.xlane.xlu0 %1327
    %v1329 = vsel %vm160, %v1323, -inf
    %1330 = vmax.xlane.f32.xlu0 %v1329
    %v1331 = vpop.xlane.xlu0 %1330
    %v1332 = vsub.f32 %v1245, %v1328
    %v1333 = vsub.f32 %v1323, %v1331
    %v1334 = vmul.f32 %v1332, 1.442695
    %v1335 = vpow.pop %v1334
    %v1336 = vmul.f32 %v1333, 1.442695
    %v1337 = vpow.pop %v1336
    %v1338 = vsel %vm160, %v1335, 0.0
    %1339 = vadd.xlane.f32.xlu0 %v1338
    %v1340 = vpop.xlane.xlu0 %1339
    %v1341 = vsel %vm160, %v1337, 0.0
    %1342 = vadd.xlane.f32.xlu0 %v1341
    %v1343 = vpop.xlane.xlu0 %1342
    %v1344 = vrcp.pop %v1340
    %v1345 = vrcp.pop %v1343
    %1346 = vrot.lane.b32.xlu0 %v149, 40
    %v1347 = vpop.permute.xlu0 %1346
    %v1350 = vsel %vm160, %v1335, 0
    %1352 = vmatprep.subr.mxu0 0.0
    %1353 = vmatpush1.msra.mxu0 %v1347
    %1354 = vmatprep.subr.mxu0 0.0
    %1355 = vmatpush1.msra.mxu0 0.0
    %1356 = vmatprep.subr.mxu0 0.0
    %1357 = vmatpush1.msra.mxu0 0.0
    %1358 = vmatprep.subr.mxu0 0.0
    %1359 = vmatpush1.msra.mxu0 0.0
    %1360 = vmatprep.subr.mxu0 0.0
    %1361 = vmatpush1.msra.mxu0 0.0
    %1362 = vmatprep.subr.mxu0 0.0
    %1363 = vmatpush1.msra.mxu0 0.0
    %1364 = vmatprep.subr.mxu0 0.0
    %1365 = vmatpush1.msra.mxu0 0.0
    %1366 = vmatprep.subr.mxu0 0.0
    %1367 = vmatpush1.msra.mxu0 0.0
    %1368 = vmatprep.subr.mxu0 0.0
    %1369 = vmatpush1.msra.mxu0 0.0
    %1370 = vmatprep.subr.mxu0 0.0
    %1371 = vmatpush1.msra.mxu0 0.0
    %1372 = vmatprep.subr.mxu0 0.0
    %1373 = vmatpush1.msra.mxu0 0.0
    %1374 = vmatprep.subr.mxu0 0.0
    %1375 = vmatpush1.msra.mxu0 0.0
    %1376 = vmatprep.subr.mxu0 0.0
    %1377 = vmatpush1.msra.mxu0 0.0
    %1378 = vmatprep.subr.mxu0 0.0
    %1379 = vmatpush1.msra.mxu0 0.0
    %1380 = vmatprep.subr.mxu0 0.0
    %1381 = vmatpush1.msra.mxu0 0.0
    %1382 = vmatprep.subr.mxu0 0.0
    %1383 = vmatpush1.msra.mxu0 0.0
    %1384 = vmatprep.subr.mxu0 0.0
    %1385 = vmatpush1.msra.mxu0 0.0
    %1386 = vmatprep.subr.mxu0 0.0
    %1387 = vmatpush1.msra.mxu0 0.0
    %1388 = vmatprep.subr.mxu0 0.0
    %1389 = vmatpush1.msra.mxu0 0.0
    %1390 = vmatprep.subr.mxu0 0.0
    %1391 = vmatpush1.msra.mxu0 0.0
    %1392 = vmatprep.subr.mxu0 0.0
    %1393 = vmatpush1.msra.mxu0 0.0
    %1394 = vmatprep.subr.mxu0 0.0
    %1395 = vmatpush1.msra.mxu0 0.0
    %1396 = vmatprep.subr.mxu0 0.0
    %1397 = vmatpush1.msra.mxu0 0.0
    %1398 = vmatprep.subr.mxu0 0.0
    %1399 = vmatpush1.msra.mxu0 0.0
    %1400 = vmatprep.subr.mxu0 0.0
    %1401 = vmatpush1.msra.mxu0 0.0
    %1402 = vmatprep.subr.mxu0 0.0
    %1403 = vmatpush1.msra.mxu0 0.0
    %1404 = vmatprep.subr.mxu0 0.0
    %1405 = vmatpush1.msra.mxu0 0.0
    %1406 = vmatprep.subr.mxu0 0.0
    %1407 = vmatpush1.msra.mxu0 0.0
    %1408 = vmatprep.subr.mxu0 0.0
    %1409 = vmatpush1.msra.mxu0 0.0
    %1410 = vmatprep.subr.mxu0 0.0
    %1411 = vmatpush1.msra.mxu0 0.0
    %1412 = vmatprep.subr.mxu0 0.0
    %1413 = vmatpush1.msra.mxu0 0.0
    %1414 = vmatprep.subr.mxu0 0.0
    %1415 = vmatpush1.msra.mxu0 0.0
    %1416 = vmatprep.mubr.f32.mxu0 0.0
    %1417 = vmatmul.mubr.f32.gmra.mrb[0].mxu0 %v1350
    %v1418 = vpop.f32.mrb[0].mxu0
    %v1419 = vadd.f32 0.0, %v1418
    %v1420 = vpop.f32.mrb[0].mxu0
    %1421 = vdwg.mxu0
    %1422 = vrot.lane.b32.xlu0 %v154, 40
    %v1423 = vpop.permute.xlu0 %1422
    %v1426 = vsel %vm160, %v1337, 0
    %1428 = vmatprep.subr.mxu0 0.0
    %1429 = vmatpush1.msra.mxu0 %v1423
    %1430 = vmatprep.subr.mxu0 0.0
    %1431 = vmatpush1.msra.mxu0 0.0
    %1432 = vmatprep.subr.mxu0 0.0
    %1433 = vmatpush1.msra.mxu0 0.0
    %1434 = vmatprep.subr.mxu0 0.0
    %1435 = vmatpush1.msra.mxu0 0.0
    %1436 = vmatprep.subr.mxu0 0.0
    %1437 = vmatpush1.msra.mxu0 0.0
    %1438 = vmatprep.subr.mxu0 0.0
    %1439 = vmatpush1.msra.mxu0 0.0
    %1440 = vmatprep.subr.mxu0 0.0
    %1441 = vmatpush1.msra.mxu0 0.0
    %1442 = vmatprep.subr.mxu0 0.0
    %1443 = vmatpush1.msra.mxu0 0.0
    %1444 = vmatprep.subr.mxu0 0.0
    %1445 = vmatpush1.msra.mxu0 0.0
    %1446 = vmatprep.subr.mxu0 0.0
    %1447 = vmatpush1.msra.mxu0 0.0
    %1448 = vmatprep.subr.mxu0 0.0
    %1449 = vmatpush1.msra.mxu0 0.0
    %1450 = vmatprep.subr.mxu0 0.0
    %1451 = vmatpush1.msra.mxu0 0.0
    %1452 = vmatprep.subr.mxu0 0.0
    %1453 = vmatpush1.msra.mxu0 0.0
    %1454 = vmatprep.subr.mxu0 0.0
    %1455 = vmatpush1.msra.mxu0 0.0
    %1456 = vmatprep.subr.mxu0 0.0
    %1457 = vmatpush1.msra.mxu0 0.0
    %1458 = vmatprep.subr.mxu0 0.0
    %1459 = vmatpush1.msra.mxu0 0.0
    %1460 = vmatprep.subr.mxu0 0.0
    %1461 = vmatpush1.msra.mxu0 0.0
    %1462 = vmatprep.subr.mxu0 0.0
    %1463 = vmatpush1.msra.mxu0 0.0
    %1464 = vmatprep.subr.mxu0 0.0
    %1465 = vmatpush1.msra.mxu0 0.0
    %1466 = vmatprep.subr.mxu0 0.0
    %1467 = vmatpush1.msra.mxu0 0.0
    %1468 = vmatprep.subr.mxu0 0.0
    %1469 = vmatpush1.msra.mxu0 0.0
    %1470 = vmatprep.subr.mxu0 0.0
    %1471 = vmatpush1.msra.mxu0 0.0
    %1472 = vmatprep.subr.mxu0 0.0
    %1473 = vmatpush1.msra.mxu0 0.0
    %1474 = vmatprep.subr.mxu0 0.0
    %1475 = vmatpush1.msra.mxu0 0.0
    %1476 = vmatprep.subr.mxu0 0.0
    %1477 = vmatpush1.msra.mxu0 0.0
    %1478 = vmatprep.subr.mxu0 0.0
    %1479 = vmatpush1.msra.mxu0 0.0
    %1480 = vmatprep.subr.mxu0 0.0
    %1481 = vmatpush1.msra.mxu0 0.0
    %1482 = vmatprep.subr.mxu0 0.0
    %1483 = vmatpush1.msra.mxu0 0.0
    %1484 = vmatprep.subr.mxu0 0.0
    %1485 = vmatpush1.msra.mxu0 0.0
    %1486 = vmatprep.subr.mxu0 0.0
    %1487 = vmatpush1.msra.mxu0 0.0
    %1488 = vmatprep.subr.mxu0 0.0
    %1489 = vmatpush1.msra.mxu0 0.0
    %1490 = vmatprep.subr.mxu0 0.0
    %1491 = vmatpush1.msra.mxu0 0.0
    %1492 = vmatprep.mubr.f32.mxu0 0.0
    %1493 = vmatmul.mubr.f32.gmra.mrb[0].mxu0 %v1426
    %v1494 = vpop.f32.mrb[0].mxu0
    %v1495 = vadd.f32 0.0, %v1494
    %v1496 = vpop.f32.mrb[0].mxu0
    %1497 = vdwg.mxu0
    %v1498 = vmul.f32 %v1419, %v1344
    %v1499 = vmul.f32 %v1495, %v1345
    %1502 = vrot.lane.b32.xlu0 %v1498, 24
    %v1503 = vpop.permute.xlu0 %1502
    %1504 = vrot.lane.b32.xlu0 %v1499, 24
    %v1505 = vpop.permute.xlu0 %1504
    %vm1508 = vcmask 261312
    %1509 = vst.msk [vmem:[#allocation2] sm:$0xff] %vm1508, %v1503
    %1510 = vst.msk [vmem:[#allocation2 + $0x8] sm:$0xff] %vm1508, %v1505
    %v1511 = vld [vmem:[#allocation2] sm:$0xff]
    %v1512 = vld [vmem:[#allocation2 + $0x8] sm:$0xff]
    %v1513 = vld [vmem:[#allocation8] sm:$0xff]
    %v1514 = vld [vmem:[#allocation8 + $0x8] sm:$0xff]
    %v1515 = vld [vmem:[#allocation8 + $0x10] sm:$0xff]
    %v1516 = vld [vmem:[#allocation8 + $0x18] sm:$0xff]
    %v1517 = vld [vmem:[%s4] sm:$0x1]
    %v1519 = vlaneseq
    %v1520 = vshrl.u32 %v1519, 7
    %v1521 = vsub.s32 0, %v1520
    %v1522 = vrot.slane %v1517, %v1521
    %v1525 = vsel %vm75, %v1511, 0
    %v1528 = vsel %vm75, %v1512, 0
    %1530 = vmatprep.subr.mxu0 0.0
    %1531 = vmatpush1.msra.mxu0 %v1513
    %1532 = vmatprep.subr.mxu0 0.0
    %1533 = vmatpush1.msra.mxu0 %v1514
    %1534 = vmatprep.subr.mxu0 0.0
    %1535 = vmatpush1.msra.mxu0 %v1515
    %1536 = vmatprep.subr.mxu0 0.0
    %1537 = vmatpush1.msra.mxu0 %v1516
    %1538 = vmatprep.subr.mxu0 0.0
    %1539 = vmatpush1.msra.mxu0 0.0
    %1540 = vmatprep.subr.mxu0 0.0
    %1541 = vmatpush1.msra.mxu0 0.0
    %1542 = vmatprep.subr.mxu0 0.0
    %1543 = vmatpush1.msra.mxu0 0.0
    %1544 = vmatprep.subr.mxu0 0.0
    %1545 = vmatpush1.msra.mxu0 0.0
    %1546 = vmatprep.subr.mxu0 0.0
    %1547 = vmatpush1.msra.mxu0 0.0
    %1548 = vmatprep.subr.mxu0 0.0
    %1549 = vmatpush1.msra.mxu0 0.0
    %1550 = vmatprep.subr.mxu0 0.0
    %1551 = vmatpush1.msra.mxu0 0.0
    %1552 = vmatprep.subr.mxu0 0.0
    %1553 = vmatpush1.msra.mxu0 0.0
    %1554 = vmatprep.subr.mxu0 0.0
    %1555 = vmatpush1.msra.mxu0 0.0
    %1556 = vmatprep.subr.mxu0 0.0
    %1557 = vmatpush1.msra.mxu0 0.0
    %1558 = vmatprep.subr.mxu0 0.0
    %1559 = vmatpush1.msra.mxu0 0.0
    %1560 = vmatprep.subr.mxu0 0.0
    %1561 = vmatpush1.msra.mxu0 0.0
    %1562 = vmatprep.subr.mxu0 0.0
    %1563 = vmatpush1.msra.mxu0 0.0
    %1564 = vmatprep.subr.mxu0 0.0
    %1565 = vmatpush1.msra.mxu0 0.0
    %1566 = vmatprep.subr.mxu0 0.0
    %1567 = vmatpush1.msra.mxu0 0.0
    %1568 = vmatprep.subr.mxu0 0.0
    %1569 = vmatpush1.msra.mxu0 0.0
    %1570 = vmatprep.subr.mxu0 0.0
    %1571 = vmatpush1.msra.mxu0 0.0
    %1572 = vmatprep.subr.mxu0 0.0
    %1573 = vmatpush1.msra.mxu0 0.0
    %1574 = vmatprep.subr.mxu0 0.0
    %1575 = vmatpush1.msra.mxu0 0.0
    %1576 = vmatprep.subr.mxu0 0.0
    %1577 = vmatpush1.msra.mxu0 0.0
    %1578 = vmatprep.subr.mxu0 0.0
    %1579 = vmatpush1.msra.mxu0 0.0
    %1580 = vmatprep.subr.mxu0 0.0
    %1581 = vmatpush1.msra.mxu0 0.0
    %1582 = vmatprep.subr.mxu0 0.0
    %1583 = vmatpush1.msra.mxu0 0.0
    %1584 = vmatprep.subr.mxu0 0.0
    %1585 = vmatpush1.msra.mxu0 0.0
    %1586 = vmatprep.subr.mxu0 0.0
    %1587 = vmatpush1.msra.mxu0 0.0
    %1588 = vmatprep.subr.mxu0 0.0
    %1589 = vmatpush1.msra.mxu0 0.0
    %1590 = vmatprep.subr.mxu0 0.0
    %1591 = vmatpush1.msra.mxu0 0.0
    %1592 = vmatprep.subr.mxu0 0.0
    %1593 = vmatpush1.msra.mxu0 0.0
    %1594 = vmatprep.mubr.f32.mxu0 0.0
    %1595 = vmatmul.mubr.f32.gmra.mrb[0].mxu0 %v1525
    %v1596 = vpop.f32.mrb[0].mxu0
    %v1597 = vadd.f32 %v1522, %v1596
    %v1598 = vpop.f32.mrb[0].mxu0
    %1599 = vmatprep.mubr.f32.mxu0 0.0
    %1600 = vmatmul.mubr.f32.gmra.mrb[0].mxu0 %v1528
    %v1601 = vpop.f32.mrb[0].mxu0
    %v1602 = vadd.f32 %v1522, %v1601
    %v1603 = vpop.f32.mrb[0].mxu0
    %1604 = vdwg.mxu0
    %1605 = vst.msk [vmem:[#allocation9] sm:$0xff] %vm75, %v1597
    %1606 = vst.msk [vmem:[#allocation9 + $0x8] sm:$0xff] %vm75, %v1602
    // Predicated region
    $region34: #{tpu_custom_call.1} parent=1 // pred_check
      _
    $region35: #{tpu_custom_call.1} parent=1 // pred_check_branch
      %1608 = sbr.rel (0) target = $region37
    $region36: #{tpu_custom_call.1} parent=1 // pred_region
      %s1610 = ssub.s32 256, 256
      %1611 = vsyncadd [#allocation5], %s1610
      %s1612 = sshll.u32 [#allocation9], 4
      %s1613 = int_to_ptr.vmem [resolvable:$true] %s1612
      %1618 = dma.vmem_to_hbm [thread:$0]  %s1613, 256, %s5, [#allocation5], 128, 128, 8
    $region37: #{tpu_custom_call.1} parent=1 // pred_fallthru
      _
    // Predicated region
    $region38: #{tpu_custom_call.1} parent=1 // pred_check
      _
    $region39: #{tpu_custom_call.1} parent=1 // pred_check_branch
      %1620 = sbr.rel (0) target = $region41
    $region40: #{tpu_custom_call.1} parent=1 // pred_region
      %1621 = dma.done [#allocation5], 256
    $region41: #{tpu_custom_call.1} parent=1 // pred_fallthru
      _
    %1622 = vsyncpa [#allocation4], 1
    %1623 = vsyncpa [#allocation7], 1
    %1624 = vsyncpa [#allocation5], 1

</llo_original>
